<compile_context>
chip_gen: v5e
topology: v5e:2x2
jax: 0.10.0
libtpu: 0.0.40
codegen_flags: <defaults>
</compile_context>

<pallas_src>
import jax
import jax.numpy as jnp
import numpy as np
from jax import lax
from jax.experimental import pallas as pl
from jax.experimental.pallas import tpu as pltpu


# -----------------------------------------------------------------------------
# Pallas kernel: bidirectional GRU recurrence + per-time row gather + linear.
#   fused weight layout (PyTorch gate order r, z, n):
#     wih/whh : (H, 3H)  so  x @ wih = [gi_r | gi_z | gi_n]
#     bih/bhh : (1, 3H)
# -----------------------------------------------------------------------------
def encoder_kernel(xlen_ref,                                    # SMEM (T,) int32
                   emb_ref,                                     # VMEM (T*N, H)
                   wih_f_ref, whh_f_ref, bih_f_ref, bhh_f_ref,  # fwd GRU params
                   wih_b_ref, whh_b_ref, bih_b_ref, bhh_b_ref,  # bwd GRU params
                   wlin_f_ref, wlin_b_ref, blin_ref,            # (H,Lp),(H,Lp),(1,Lp)
                   out_ref,                                     # VMEM (T, Lp)
                   gi_f_ref, gi_b_ref,                          # VMEM (T*N, 3H)
                   h_f_ref, h_b_ref,                            # VMEM (N, H)
                   rows_f_ref, rows_b_ref):                     # VMEM (T, H)
    T = xlen_ref.shape[0]
    TN, H = emb_ref.shape
    N = TN // T

    # ---- hoisted input projections: one large MXU matmul per direction ----
    emb2d = emb_ref[...]                                        # (T*N, H)
    gi_f_ref[...] = (jnp.dot(emb2d, wih_f_ref[...],
                             preferred_element_type=jnp.float32) + bih_f_ref[...])
    gi_b_ref[...] = (jnp.dot(emb2d, wih_b_ref[...],
                             preferred_element_type=jnp.float32) + bih_b_ref[...])

    h_f_ref[...] = jnp.zeros((N, H), jnp.float32)
    h_b_ref[...] = jnp.zeros((N, H), jnp.float32)

    n_iota = lax.broadcasted_iota(jnp.int32, (1, N), 1)         # hoisted (1, N)

    def gru_step(t_actual, gi_ref, h_ref, rows_ref, whh_ref, bhh_ref):
        off = pl.multiple_of(t_actual * N, N)
        gi = gi_ref[pl.ds(off, N), :]                           # (N, 3H) precomputed
        h = h_ref[...]                                          # (N, H)
        # single fused recurrent gate matmul per step
        gh = (jnp.dot(h, whh_ref[...], preferred_element_type=jnp.float32)
              + bhh_ref[...])                                   # (N, 3H)
        r = jax.nn.sigmoid(gi[:, 0:H] + gh[:, 0:H])
        z = jax.nn.sigmoid(gi[:, H:2 * H] + gh[:, H:2 * H])
        n = jnp.tanh(gi[:, 2 * H:3 * H] + r * gh[:, 2 * H:3 * H])
        h_new = (1.0 - z) * n + z * h
        h_ref[...] = h_new
        # gather row (x_len[t]-1) of h at time t via a tiny one-hot MXU matmul,
        # then store it to its time slot (O(T*H) total instead of O(T^2*H))
        idx = xlen_ref[t_actual] - 1
        sel = (n_iota == idx).astype(jnp.float32)               # (1, N)
        row = jnp.dot(sel, h_new, preferred_element_type=jnp.float32)   # (1, H)
        rows_ref[pl.ds(t_actual, 1), :] = row

    def body(t, carry):
        # fwd step t and bwd step T-1-t are independent chains: interleave them
        # so their MXU/EUP latencies overlap.
        gru_step(t, gi_f_ref, h_f_ref, rows_f_ref, whh_f_ref, bhh_f_ref)
        gru_step(T - 1 - t, gi_b_ref, h_b_ref, rows_b_ref, whh_b_ref, bhh_b_ref)
        return carry

    lax.fori_loop(0, T, body, 0, unroll=True)

    # hidden2latent:  [rows_f | rows_b] @ W.T + b   (W pre-split per direction)
    out_ref[...] = (jnp.dot(rows_f_ref[...], wlin_f_ref[...],
                            preferred_element_type=jnp.float32)
                    + jnp.dot(rows_b_ref[...], wlin_b_ref[...],
                              preferred_element_type=jnp.float32)
                    + blin_ref[...])


# -----------------------------------------------------------------------------
# wrapper
# -----------------------------------------------------------------------------
def encoder_forward(x, x_len, params):
    emb = params["emb_table"][x].astype(jnp.float32)            # (B, S, H) lookup (glue)
    # TODO(synk): nn.Dropout is stochastic; treated as identity (eval mode).
    B, S, H = emb.shape
    L = params["blin"].shape[-1]
    Lp = pl.cdiv(L, 128) * 128                                  # lane-dense output

    emb2d = emb.reshape(B * S, H)

    pad_lin = lambda w: jnp.pad(w, ((0, 0), (0, Lp - L)))
    wlin_f = pad_lin(params["wlin_f"])
    wlin_b = pad_lin(params["wlin_b"])
    blin = pad_lin(params["blin"])

    smem = pl.BlockSpec(memory_space=pltpu.MemorySpace.SMEM)
    vmem = pl.BlockSpec(memory_space=pltpu.MemorySpace.VMEM)

    scratch = [
        pltpu.VMEM((B * S, 3 * H), jnp.float32),   # gi fwd
        pltpu.VMEM((B * S, 3 * H), jnp.float32),   # gi bwd
        pltpu.VMEM((S, H), jnp.float32),           # h fwd
        pltpu.VMEM((S, H), jnp.float32),           # h bwd
        pltpu.VMEM((B, H), jnp.float32),           # gathered rows fwd
        pltpu.VMEM((B, H), jnp.float32),           # gathered rows bwd
    ]

    operands = (x_len.astype(jnp.int32), emb2d,
                params["wih_f"], params["whh_f"], params["bih_f"], params["bhh_f"],
                params["wih_b"], params["whh_b"], params["bih_b"], params["bhh_b"],
                wlin_f, wlin_b, blin)

    op_bytes = sum(int(np.prod(a.shape)) * a.dtype.itemsize for a in operands)
    scr_bytes = (2 * B * S * 3 * H + 2 * S * H + 2 * B * H + B * Lp) * 4
    vmem_limit = int(min(max(2 * op_bytes + scr_bytes + (1 << 20), 4 << 20), 64 << 20))

    out = pl.pallas_call(
        encoder_kernel,
        out_shape=jax.ShapeDtypeStruct((B, Lp), jnp.float32),
        in_specs=[smem] + [vmem] * 12,
        out_specs=vmem,
        scratch_shapes=scratch,
        compiler_params=pltpu.CompilerParams(vmem_limit_bytes=vmem_limit),
    )(*operands)
    return out[:, :L]


# -----------------------------------------------------------------------------
# pure-JAX reference (same math, lax.scan) for correctness check
# -----------------------------------------------------------------------------
def _gru_cell_ref(x_t, h, wih, whh, bih, bhh):
    H = h.shape[-1]
    gi = x_t @ wih + bih
    gh = h @ whh + bhh
    r = jax.nn.sigmoid(gi[:, :H] + gh[:, :H])
    z = jax.nn.sigmoid(gi[:, H:2 * H] + gh[:, H:2 * H])
    n = jnp.tanh(gi[:, 2 * H:] + r * gh[:, 2 * H:])
    return (1.0 - z) * n + z * h


def reference_forward(x, x_len, params):
    emb = params["emb_table"][x].astype(jnp.float32)            # (T, N, H)
    T, N, H = emb.shape

    def make_scan(wih, whh, bih, bhh):
        def body(h, x_t):
            h2 = _gru_cell_ref(x_t, h, wih, whh, bih, bhh)
            return h2, h2
        return body

    h0 = jnp.zeros((N, H), jnp.float32)
    _, out_f = lax.scan(make_scan(params["wih_f"], params["whh_f"],
                                  params["bih_f"], params["bhh_f"]), h0, emb)
    _, out_b_rev = lax.scan(make_scan(params["wih_b"], params["whh_b"],
                                      params["bih_b"], params["bhh_b"]),
                            h0, emb[::-1])
    out_b = out_b_rev[::-1]
    idx = (x_len - 1).astype(jnp.int32)
    last_f = out_f[jnp.arange(T), idx]                          # (T, H)
    last_b = out_b[jnp.arange(T), idx]                          # (T, H)
    return (last_f @ params["wlin_f"] + last_b @ params["wlin_b"]
            + params["blin"])


# -----------------------------------------------------------------------------
# deterministic parameter init (shapes follow nn.GRU / nn.Linear / nn.Embedding,
# re-packed into the fused (H, 3H) / (1, 3H) layout used by the kernel)
# -----------------------------------------------------------------------------
def init_params(key, vocab, hidden, latent):
    ks = jax.random.split(key, 12)
    s = 0.1

    def pack_w(kw):  # PyTorch weight (3H, H), gate order (r, z, n) -> fused (H, 3H)
        w = jax.random.normal(kw, (3 * hidden, hidden), jnp.float32) * s
        per_gate = jnp.transpose(w.reshape(3, hidden, hidden), (0, 2, 1))  # (3, Hin, Hout)
        return jnp.concatenate([per_gate[0], per_gate[1], per_gate[2]], axis=1)

    def pack_b(kb):
        return (jax.random.normal(kb, (3 * hidden,), jnp.float32) * s
                ).reshape(1, 3 * hidden)

    w_lin = jax.random.normal(ks[9], (latent, 2 * hidden), jnp.float32) * s
    return {
        "emb_table": jax.random.normal(ks[0], (vocab, hidden), jnp.float32) * s,
        "wih_f": pack_w(ks[1]), "whh_f": pack_w(ks[2]),
        "bih_f": pack_b(ks[3]), "bhh_f": pack_b(ks[4]),
        "wih_b": pack_w(ks[5]), "whh_b": pack_w(ks[6]),
        "bih_b": pack_b(ks[7]), "bhh_b": pack_b(ks[8]),
        "wlin_f": w_lin[:, :hidden].T,                          # (H, L)
        "wlin_b": w_lin[:, hidden:].T,                          # (H, L)
        "blin": (jax.random.normal(ks[10], (latent,), jnp.float32) * s
                 ).reshape(1, latent),
    }


if __name__ == "__main__":
    B, S, H, L, V = 4, 8, 32, 16, 50   # batch, seq, hidden, latent, vocab

    key = jax.random.PRNGKey(0)
    kp, kx, kl = jax.random.split(key, 3)
    params = init_params(kp, V, H, L)

    x = jax.random.randint(kx, (B, S), 0, V, dtype=jnp.int32)
    x_len = jax.random.randint(kl, (B,), 1, S + 1, dtype=jnp.int32)

    out = jax.block_until_ready(encoder_forward(x, x_len, params))
    ref = jax.block_until_ready(reference_forward(x, x_len, params))
    np.testing.assert_allclose(np.asarray(out), np.asarray(ref),
                               rtol=1e-5, atol=1e-5)
    assert out.shape == (B, L)
    print("KERNEL_OK")
</pallas_src>

<mosaic_0001>
module attributes {stable_mosaic.version = 11 : i64} {
  func.func @encoder_kernel(%arg0: memref<4xi32, #tpu.memory_space<smem>>, %arg1: memref<32x32xf32, #tpu.memory_space<vmem>>, %arg2: memref<32x96xf32, #tpu.memory_space<vmem>>, %arg3: memref<32x96xf32, #tpu.memory_space<vmem>>, %arg4: memref<1x96xf32, #tpu.memory_space<vmem>>, %arg5: memref<1x96xf32, #tpu.memory_space<vmem>>, %arg6: memref<32x96xf32, #tpu.memory_space<vmem>>, %arg7: memref<32x96xf32, #tpu.memory_space<vmem>>, %arg8: memref<1x96xf32, #tpu.memory_space<vmem>>, %arg9: memref<1x96xf32, #tpu.memory_space<vmem>>, %arg10: memref<32x128xf32, #tpu.memory_space<vmem>>, %arg11: memref<32x128xf32, #tpu.memory_space<vmem>>, %arg12: memref<1x128xf32, #tpu.memory_space<vmem>>, %arg13: memref<4x128xf32, #tpu.memory_space<vmem>>, %arg14: memref<32x96xf32, #tpu.memory_space<vmem>>, %arg15: memref<32x96xf32, #tpu.memory_space<vmem>>, %arg16: memref<8x32xf32, #tpu.memory_space<vmem>>, %arg17: memref<8x32xf32, #tpu.memory_space<vmem>>, %arg18: memref<4x32xf32, #tpu.memory_space<vmem>>, %arg19: memref<4x32xf32, #tpu.memory_space<vmem>>) attributes {dimension_semantics = [], scalar_prefetch = 0 : i64, scratch_operands = 6 : i64, tpu.core_type = #tpu.core_type<tc>} {
    %c0 = arith.constant 0 : index
    %c0_0 = arith.constant 0 : index
    %0 = vector.load %arg1[%c0, %c0_0] : memref<32x32xf32, #tpu.memory_space<vmem>>, vector<32x32xf32>
    %c0_1 = arith.constant 0 : index
    %c0_2 = arith.constant 0 : index
    %1 = vector.load %arg2[%c0_1, %c0_2] : memref<32x96xf32, #tpu.memory_space<vmem>>, vector<32x96xf32>
    %cst = arith.constant dense<0.000000e+00> : vector<32x96xf32>
    %2 = tpu.matmul %0, %1, %cst {dimension_numbers = #tpu.dot_dimension_numbers<[1], [0], [0], [1], [0, 0, 1, 1], [], []>} : vector<32x32xf32>, vector<32x96xf32>, vector<32x96xf32> -> vector<32x96xf32>
    %c0_3 = arith.constant 0 : index
    %c0_4 = arith.constant 0 : index
    %3 = vector.load %arg4[%c0_3, %c0_4] : memref<1x96xf32, #tpu.memory_space<vmem>>, vector<1x96xf32>
    %4 = vector.broadcast %3 : vector<1x96xf32> to vector<32x96xf32>
    %5 = arith.addf %2, %4 : vector<32x96xf32>
    %c0_5 = arith.constant 0 : index
    %c0_6 = arith.constant 0 : index
    %6 = vector.load %arg14[%c0_5, %c0_6] : memref<32x96xf32, #tpu.memory_space<vmem>>, vector<32x96xf32>
    tpu.vector_store %arg14[%c0_5, %c0_6], %5 {strides = array<i32>} : memref<32x96xf32, #tpu.memory_space<vmem>>, vector<32x96xf32>,
    %c0_7 = arith.constant 0 : index
    %c0_8 = arith.constant 0 : index
    %7 = vector.load %arg6[%c0_7, %c0_8] : memref<32x96xf32, #tpu.memory_space<vmem>>, vector<32x96xf32>
    %cst_9 = arith.constant dense<0.000000e+00> : vector<32x96xf32>
    %8 = tpu.matmul %0, %7, %cst_9 {dimension_numbers = #tpu.dot_dimension_numbers<[1], [0], [0], [1], [0, 0, 1, 1], [], []>} : vector<32x32xf32>, vector<32x96xf32>, vector<32x96xf32> -> vector<32x96xf32>
    %c0_10 = arith.constant 0 : index
    %c0_11 = arith.constant 0 : index
    %9 = vector.load %arg8[%c0_10, %c0_11] : memref<1x96xf32, #tpu.memory_space<vmem>>, vector<1x96xf32>
    %10 = vector.broadcast %9 : vector<1x96xf32> to vector<32x96xf32>
    %11 = arith.addf %8, %10 : vector<32x96xf32>
    %c0_12 = arith.constant 0 : index
    %c0_13 = arith.constant 0 : index
    %12 = vector.load %arg15[%c0_12, %c0_13] : memref<32x96xf32, #tpu.memory_space<vmem>>, vector<32x96xf32>
    tpu.vector_store %arg15[%c0_12, %c0_13], %11 {strides = array<i32>} : memref<32x96xf32, #tpu.memory_space<vmem>>, vector<32x96xf32>,
    %cst_14 = arith.constant 0.000000e+00 : f32
    %13 = vector.broadcast %cst_14 : f32 to vector<8x32xf32>
    %c0_15 = arith.constant 0 : index
    %c0_16 = arith.constant 0 : index
    %14 = vector.load %arg16[%c0_15, %c0_16] : memref<8x32xf32, #tpu.memory_space<vmem>>, vector<8x32xf32>
    tpu.vector_store %arg16[%c0_15, %c0_16], %13 {strides = array<i32>} : memref<8x32xf32, #tpu.memory_space<vmem>>, vector<8x32xf32>,
    %cst_17 = arith.constant 0.000000e+00 : f32
    %15 = vector.broadcast %cst_17 : f32 to vector<8x32xf32>
    %c0_18 = arith.constant 0 : index
    %c0_19 = arith.constant 0 : index
    %16 = vector.load %arg17[%c0_18, %c0_19] : memref<8x32xf32, #tpu.memory_space<vmem>>, vector<8x32xf32>
    tpu.vector_store %arg17[%c0_18, %c0_19], %15 {strides = array<i32>} : memref<8x32xf32, #tpu.memory_space<vmem>>, vector<8x32xf32>,
    %17 = tpu.iota {dimensions = array<i32: 1>} : vector<1x8xi32>
    %c0_i32 = arith.constant 0 : i32
    %c8_i32 = arith.constant 8 : i32
    %18 = arith.muli %c0_i32, %c8_i32 : i32
    %19 = tpu.assume_multiple %18, 8 : i32
    %20 = arith.index_cast %19 : i32 to index
    %c0_20 = arith.constant 0 : index
    %21 = vector.load %arg14[%20, %c0_20] : memref<32x96xf32, #tpu.memory_space<vmem>>, vector<8x96xf32>
    %c0_21 = arith.constant 0 : index
    %c0_22 = arith.constant 0 : index
    %22 = vector.load %arg16[%c0_21, %c0_22] : memref<8x32xf32, #tpu.memory_space<vmem>>, vector<8x32xf32>
    %c0_23 = arith.constant 0 : index
    %c0_24 = arith.constant 0 : index
    %23 = vector.load %arg3[%c0_23, %c0_24] : memref<32x96xf32, #tpu.memory_space<vmem>>, vector<32x96xf32>
    %cst_25 = arith.constant dense<0.000000e+00> : vector<8x96xf32>
    %24 = tpu.matmul %22, %23, %cst_25 {dimension_numbers = #tpu.dot_dimension_numbers<[1], [0], [0], [1], [0, 0, 1, 1], [], []>} : vector<8x32xf32>, vector<32x96xf32>, vector<8x96xf32> -> vector<8x96xf32>
    %c0_26 = arith.constant 0 : index
    %c0_27 = arith.constant 0 : index
    %25 = vector.load %arg5[%c0_26, %c0_27] : memref<1x96xf32, #tpu.memory_space<vmem>>, vector<1x96xf32>
    %26 = vector.broadcast %25 : vector<1x96xf32> to vector<8x96xf32>
    %27 = arith.addf %24, %26 : vector<8x96xf32>
    %28 = vector.extract_strided_slice %21 {offsets = [0, 0], sizes = [8, 32], strides = [1, 1]} : vector<8x96xf32> to vector<8x32xf32>
    %29 = vector.extract_strided_slice %27 {offsets = [0, 0], sizes = [8, 32], strides = [1, 1]} : vector<8x96xf32> to vector<8x32xf32>
    %30 = arith.addf %28, %29 : vector<8x32xf32>
    %31 = arith.negf %30 : vector<8x32xf32>
    %32 = math.exp %31 : vector<8x32xf32>
    %cst_28 = arith.constant 1.000000e+00 : f32
    %33 = vector.broadcast %cst_28 : f32 to vector<8x32xf32>
    %34 = arith.addf %33, %32 : vector<8x32xf32>
    %35 = arith.divf %33, %34 : vector<8x32xf32>
    %36 = vector.extract_strided_slice %21 {offsets = [0, 32], sizes = [8, 32], strides = [1, 1]} : vector<8x96xf32> to vector<8x32xf32>
    %37 = vector.extract_strided_slice %27 {offsets = [0, 32], sizes = [8, 32], strides = [1, 1]} : vector<8x96xf32> to vector<8x32xf32>
    %38 = arith.addf %36, %37 : vector<8x32xf32>
    %39 = arith.negf %38 : vector<8x32xf32>
    %40 = math.exp %39 : vector<8x32xf32>
    %cst_29 = arith.constant 1.000000e+00 : f32
    %41 = vector.broadcast %cst_29 : f32 to vector<8x32xf32>
    %42 = arith.addf %41, %40 : vector<8x32xf32>
    %43 = arith.divf %41, %42 : vector<8x32xf32>
    %44 = vector.extract_strided_slice %21 {offsets = [0, 64], sizes = [8, 32], strides = [1, 1]} : vector<8x96xf32> to vector<8x32xf32>
    %45 = vector.extract_strided_slice %27 {offsets = [0, 64], sizes = [8, 32], strides = [1, 1]} : vector<8x96xf32> to vector<8x32xf32>
    %46 = arith.mulf %35, %45 : vector<8x32xf32>
    %47 = arith.addf %44, %46 : vector<8x32xf32>
    %48 = math.tanh %47 : vector<8x32xf32>
    %cst_30 = arith.constant 1.000000e+00 : f32
    %49 = vector.broadcast %cst_30 : f32 to vector<8x32xf32>
    %50 = arith.subf %49, %43 : vector<8x32xf32>
    %51 = arith.mulf %50, %48 : vector<8x32xf32>
    %52 = arith.mulf %43, %22 : vector<8x32xf32>
    %53 = arith.addf %51, %52 : vector<8x32xf32>
    %c0_31 = arith.constant 0 : index
    %c0_32 = arith.constant 0 : index
    %54 = vector.load %arg16[%c0_31, %c0_32] : memref<8x32xf32, #tpu.memory_space<vmem>>, vector<8x32xf32>
    tpu.vector_store %arg16[%c0_31, %c0_32], %53 {strides = array<i32>} : memref<8x32xf32, #tpu.memory_space<vmem>>, vector<8x32xf32>,
    %55 = arith.index_cast %c0_i32 : i32 to index
    %56 = memref.load %arg0[%55] : memref<4xi32, #tpu.memory_space<smem>>
    %c1_i32 = arith.constant 1 : i32
    %57 = arith.subi %56, %c1_i32 : i32
    %58 = vector.broadcast %57 : i32 to vector<1x8xi32>
    %59 = arith.cmpi eq, %17, %58 : vector<1x8xi32>
    %60 = arith.extui %59 : vector<1x8xi1> to vector<1x8xi32>
    %61 = arith.sitofp %60 : vector<1x8xi32> to vector<1x8xf32>
    %cst_33 = arith.constant dense<0.000000e+00> : vector<1x32xf32>
    %62 = tpu.matmul %61, %53, %cst_33 {dimension_numbers = #tpu.dot_dimension_numbers<[1], [0], [0], [1], [0, 0, 1, 1], [], []>} : vector<1x8xf32>, vector<8x32xf32>, vector<1x32xf32> -> vector<1x32xf32>
    %63 = arith.index_cast %c0_i32 : i32 to index
    %c0_34 = arith.constant 0 : index
    %64 = vector.load %arg18[%63, %c0_34] : memref<4x32xf32, #tpu.memory_space<vmem>>, vector<1x32xf32>
    tpu.vector_store %arg18[%63, %c0_34], %62 {strides = array<i32>} : memref<4x32xf32, #tpu.memory_space<vmem>>, vector<1x32xf32>,
    %c3_i32 = arith.constant 3 : i32
    %65 = arith.subi %c3_i32, %c0_i32 : i32
    %c8_i32_35 = arith.constant 8 : i32
    %66 = arith.muli %65, %c8_i32_35 : i32
    %67 = tpu.assume_multiple %66, 8 : i32
    %68 = arith.index_cast %67 : i32 to index
    %c0_36 = arith.constant 0 : index
    %69 = vector.load %arg15[%68, %c0_36] : memref<32x96xf32, #tpu.memory_space<vmem>>, vector<8x96xf32>
    %c0_37 = arith.constant 0 : index
    %c0_38 = arith.constant 0 : index
    %70 = vector.load %arg17[%c0_37, %c0_38] : memref<8x32xf32, #tpu.memory_space<vmem>>, vector<8x32xf32>
    %c0_39 = arith.constant 0 : index
    %c0_40 = arith.constant 0 : index
    %71 = vector.load %arg7[%c0_39, %c0_40] : memref<32x96xf32, #tpu.memory_space<vmem>>, vector<32x96xf32>
    %cst_41 = arith.constant dense<0.000000e+00> : vector<8x96xf32>
    %72 = tpu.matmul %70, %71, %cst_41 {dimension_numbers = #tpu.dot_dimension_numbers<[1], [0], [0], [1], [0, 0, 1, 1], [], []>} : vector<8x32xf32>, vector<32x96xf32>, vector<8x96xf32> -> vector<8x96xf32>
    %c0_42 = arith.constant 0 : index
    %c0_43 = arith.constant 0 : index
    %73 = vector.load %arg9[%c0_42, %c0_43] : memref<1x96xf32, #tpu.memory_space<vmem>>, vector<1x96xf32>
    %74 = vector.broadcast %73 : vector<1x96xf32> to vector<8x96xf32>
    %75 = arith.addf %72, %74 : vector<8x96xf32>
    %76 = vector.extract_strided_slice %69 {offsets = [0, 0], sizes = [8, 32], strides = [1, 1]} : vector<8x96xf32> to vector<8x32xf32>
    %77 = vector.extract_strided_slice %75 {offsets = [0, 0], sizes = [8, 32], strides = [1, 1]} : vector<8x96xf32> to vector<8x32xf32>
    %78 = arith.addf %76, %77 : vector<8x32xf32>
    %79 = arith.negf %78 : vector<8x32xf32>
    %80 = math.exp %79 : vector<8x32xf32>
    %cst_44 = arith.constant 1.000000e+00 : f32
    %81 = vector.broadcast %cst_44 : f32 to vector<8x32xf32>
    %82 = arith.addf %81, %80 : vector<8x32xf32>
    %83 = arith.divf %81, %82 : vector<8x32xf32>
    %84 = vector.extract_strided_slice %69 {offsets = [0, 32], sizes = [8, 32], strides = [1, 1]} : vector<8x96xf32> to vector<8x32xf32>
    %85 = vector.extract_strided_slice %75 {offsets = [0, 32], sizes = [8, 32], strides = [1, 1]} : vector<8x96xf32> to vector<8x32xf32>
    %86 = arith.addf %84, %85 : vector<8x32xf32>
    %87 = arith.negf %86 : vector<8x32xf32>
    %88 = math.exp %87 : vector<8x32xf32>
    %cst_45 = arith.constant 1.000000e+00 : f32
    %89 = vector.broadcast %cst_45 : f32 to vector<8x32xf32>
    %90 = arith.addf %89, %88 : vector<8x32xf32>
    %91 = arith.divf %89, %90 : vector<8x32xf32>
    %92 = vector.extract_strided_slice %69 {offsets = [0, 64], sizes = [8, 32], strides = [1, 1]} : vector<8x96xf32> to vector<8x32xf32>
    %93 = vector.extract_strided_slice %75 {offsets = [0, 64], sizes = [8, 32], strides = [1, 1]} : vector<8x96xf32> to vector<8x32xf32>
    %94 = arith.mulf %83, %93 : vector<8x32xf32>
    %95 = arith.addf %92, %94 : vector<8x32xf32>
    %96 = math.tanh %95 : vector<8x32xf32>
    %cst_46 = arith.constant 1.000000e+00 : f32
    %97 = vector.broadcast %cst_46 : f32 to vector<8x32xf32>
    %98 = arith.subf %97, %91 : vector<8x32xf32>
    %99 = arith.mulf %98, %96 : vector<8x32xf32>
    %100 = arith.mulf %91, %70 : vector<8x32xf32>
    %101 = arith.addf %99, %100 : vector<8x32xf32>
    %c0_47 = arith.constant 0 : index
    %c0_48 = arith.constant 0 : index
    %102 = vector.load %arg17[%c0_47, %c0_48] : memref<8x32xf32, #tpu.memory_space<vmem>>, vector<8x32xf32>
    tpu.vector_store %arg17[%c0_47, %c0_48], %101 {strides = array<i32>} : memref<8x32xf32, #tpu.memory_space<vmem>>, vector<8x32xf32>,
    %103 = arith.index_cast %65 : i32 to index
    %104 = memref.load %arg0[%103] : memref<4xi32, #tpu.memory_space<smem>>
    %c1_i32_49 = arith.constant 1 : i32
    %105 = arith.subi %104, %c1_i32_49 : i32
    %106 = vector.broadcast %105 : i32 to vector<1x8xi32>
    %107 = arith.cmpi eq, %17, %106 : vector<1x8xi32>
    %108 = arith.extui %107 : vector<1x8xi1> to vector<1x8xi32>
    %109 = arith.sitofp %108 : vector<1x8xi32> to vector<1x8xf32>
    %cst_50 = arith.constant dense<0.000000e+00> : vector<1x32xf32>
    %110 = tpu.matmul %109, %101, %cst_50 {dimension_numbers = #tpu.dot_dimension_numbers<[1], [0], [0], [1], [0, 0, 1, 1], [], []>} : vector<1x8xf32>, vector<8x32xf32>, vector<1x32xf32> -> vector<1x32xf32>
    %111 = arith.index_cast %65 : i32 to index
    %c0_51 = arith.constant 0 : index
    %112 = vector.load %arg19[%111, %c0_51] : memref<4x32xf32, #tpu.memory_space<vmem>>, vector<1x32xf32>
    tpu.vector_store %arg19[%111, %c0_51], %110 {strides = array<i32>} : memref<4x32xf32, #tpu.memory_space<vmem>>, vector<1x32xf32>,
    %c1_i32_52 = arith.constant 1 : i32
    %c8_i32_53 = arith.constant 8 : i32
    %113 = arith.muli %c1_i32_52, %c8_i32_53 : i32
    %114 = tpu.assume_multiple %113, 8 : i32
    %115 = arith.index_cast %114 : i32 to index
    %c0_54 = arith.constant 0 : index
    %116 = vector.load %arg14[%115, %c0_54] : memref<32x96xf32, #tpu.memory_space<vmem>>, vector<8x96xf32>
    %c0_55 = arith.constant 0 : index
    %c0_56 = arith.constant 0 : index
    %117 = vector.load %arg16[%c0_55, %c0_56] : memref<8x32xf32, #tpu.memory_space<vmem>>, vector<8x32xf32>
    %c0_57 = arith.constant 0 : index
    %c0_58 = arith.constant 0 : index
    %118 = vector.load %arg3[%c0_57, %c0_58] : memref<32x96xf32, #tpu.memory_space<vmem>>, vector<32x96xf32>
    %cst_59 = arith.constant dense<0.000000e+00> : vector<8x96xf32>
    %119 = tpu.matmul %117, %118, %cst_59 {dimension_numbers = #tpu.dot_dimension_numbers<[1], [0], [0], [1], [0, 0, 1, 1], [], []>} : vector<8x32xf32>, vector<32x96xf32>, vector<8x96xf32> -> vector<8x96xf32>
    %c0_60 = arith.constant 0 : index
    %c0_61 = arith.constant 0 : index
    %120 = vector.load %arg5[%c0_60, %c0_61] : memref<1x96xf32, #tpu.memory_space<vmem>>, vector<1x96xf32>
    %121 = vector.broadcast %120 : vector<1x96xf32> to vector<8x96xf32>
    %122 = arith.addf %119, %121 : vector<8x96xf32>
    %123 = vector.extract_strided_slice %116 {offsets = [0, 0], sizes = [8, 32], strides = [1, 1]} : vector<8x96xf32> to vector<8x32xf32>
    %124 = vector.extract_strided_slice %122 {offsets = [0, 0], sizes = [8, 32], strides = [1, 1]} : vector<8x96xf32> to vector<8x32xf32>
    %125 = arith.addf %123, %124 : vector<8x32xf32>
    %126 = arith.negf %125 : vector<8x32xf32>
    %127 = math.exp %126 : vector<8x32xf32>
    %cst_62 = arith.constant 1.000000e+00 : f32
    %128 = vector.broadcast %cst_62 : f32 to vector<8x32xf32>
    %129 = arith.addf %128, %127 : vector<8x32xf32>
    %130 = arith.divf %128, %129 : vector<8x32xf32>
    %131 = vector.extract_strided_slice %116 {offsets = [0, 32], sizes = [8, 32], strides = [1, 1]} : vector<8x96xf32> to vector<8x32xf32>
    %132 = vector.extract_strided_slice %122 {offsets = [0, 32], sizes = [8, 32], strides = [1, 1]} : vector<8x96xf32> to vector<8x32xf32>
    %133 = arith.addf %131, %132 : vector<8x32xf32>
    %134 = arith.negf %133 : vector<8x32xf32>
    %135 = math.exp %134 : vector<8x32xf32>
    %cst_63 = arith.constant 1.000000e+00 : f32
    %136 = vector.broadcast %cst_63 : f32 to vector<8x32xf32>
    %137 = arith.addf %136, %135 : vector<8x32xf32>
    %138 = arith.divf %136, %137 : vector<8x32xf32>
    %139 = vector.extract_strided_slice %116 {offsets = [0, 64], sizes = [8, 32], strides = [1, 1]} : vector<8x96xf32> to vector<8x32xf32>
    %140 = vector.extract_strided_slice %122 {offsets = [0, 64], sizes = [8, 32], strides = [1, 1]} : vector<8x96xf32> to vector<8x32xf32>
    %141 = arith.mulf %130, %140 : vector<8x32xf32>
    %142 = arith.addf %139, %141 : vector<8x32xf32>
    %143 = math.tanh %142 : vector<8x32xf32>
    %cst_64 = arith.constant 1.000000e+00 : f32
    %144 = vector.broadcast %cst_64 : f32 to vector<8x32xf32>
    %145 = arith.subf %144, %138 : vector<8x32xf32>
    %146 = arith.mulf %145, %143 : vector<8x32xf32>
    %147 = arith.mulf %138, %117 : vector<8x32xf32>
    %148 = arith.addf %146, %147 : vector<8x32xf32>
    %c0_65 = arith.constant 0 : index
    %c0_66 = arith.constant 0 : index
    %149 = vector.load %arg16[%c0_65, %c0_66] : memref<8x32xf32, #tpu.memory_space<vmem>>, vector<8x32xf32>
    tpu.vector_store %arg16[%c0_65, %c0_66], %148 {strides = array<i32>} : memref<8x32xf32, #tpu.memory_space<vmem>>, vector<8x32xf32>,
    %150 = arith.index_cast %c1_i32_52 : i32 to index
    %151 = memref.load %arg0[%150] : memref<4xi32, #tpu.memory_space<smem>>
    %c1_i32_67 = arith.constant 1 : i32
    %152 = arith.subi %151, %c1_i32_67 : i32
    %153 = vector.broadcast %152 : i32 to vector<1x8xi32>
    %154 = arith.cmpi eq, %17, %153 : vector<1x8xi32>
    %155 = arith.extui %154 : vector<1x8xi1> to vector<1x8xi32>
    %156 = arith.sitofp %155 : vector<1x8xi32> to vector<1x8xf32>
    %cst_68 = arith.constant dense<0.000000e+00> : vector<1x32xf32>
    %157 = tpu.matmul %156, %148, %cst_68 {dimension_numbers = #tpu.dot_dimension_numbers<[1], [0], [0], [1], [0, 0, 1, 1], [], []>} : vector<1x8xf32>, vector<8x32xf32>, vector<1x32xf32> -> vector<1x32xf32>
    %158 = arith.index_cast %c1_i32_52 : i32 to index
    %c0_69 = arith.constant 0 : index
    %159 = vector.load %arg18[%158, %c0_69] : memref<4x32xf32, #tpu.memory_space<vmem>>, vector<1x32xf32>
    tpu.vector_store %arg18[%158, %c0_69], %157 {strides = array<i32>} : memref<4x32xf32, #tpu.memory_space<vmem>>, vector<1x32xf32>,
    %c3_i32_70 = arith.constant 3 : i32
    %160 = arith.subi %c3_i32_70, %c1_i32_52 : i32
    %c8_i32_71 = arith.constant 8 : i32
    %161 = arith.muli %160, %c8_i32_71 : i32
    %162 = tpu.assume_multiple %161, 8 : i32
    %163 = arith.index_cast %162 : i32 to index
    %c0_72 = arith.constant 0 : index
    %164 = vector.load %arg15[%163, %c0_72] : memref<32x96xf32, #tpu.memory_space<vmem>>, vector<8x96xf32>
    %c0_73 = arith.constant 0 : index
    %c0_74 = arith.constant 0 : index
    %165 = vector.load %arg17[%c0_73, %c0_74] : memref<8x32xf32, #tpu.memory_space<vmem>>, vector<8x32xf32>
    %c0_75 = arith.constant 0 : index
    %c0_76 = arith.constant 0 : index
    %166 = vector.load %arg7[%c0_75, %c0_76] : memref<32x96xf32, #tpu.memory_space<vmem>>, vector<32x96xf32>
    %cst_77 = arith.constant dense<0.000000e+00> : vector<8x96xf32>
    %167 = tpu.matmul %165, %166, %cst_77 {dimension_numbers = #tpu.dot_dimension_numbers<[1], [0], [0], [1], [0, 0, 1, 1], [], []>} : vector<8x32xf32>, vector<32x96xf32>, vector<8x96xf32> -> vector<8x96xf32>
    %c0_78 = arith.constant 0 : index
    %c0_79 = arith.constant 0 : index
    %168 = vector.load %arg9[%c0_78, %c0_79] : memref<1x96xf32, #tpu.memory_space<vmem>>, vector<1x96xf32>
    %169 = vector.broadcast %168 : vector<1x96xf32> to vector<8x96xf32>
    %170 = arith.addf %167, %169 : vector<8x96xf32>
    %171 = vector.extract_strided_slice %164 {offsets = [0, 0], sizes = [8, 32], strides = [1, 1]} : vector<8x96xf32> to vector<8x32xf32>
    %172 = vector.extract_strided_slice %170 {offsets = [0, 0], sizes = [8, 32], strides = [1, 1]} : vector<8x96xf32> to vector<8x32xf32>
    %173 = arith.addf %171, %172 : vector<8x32xf32>
    %174 = arith.negf %173 : vector<8x32xf32>
    %175 = math.exp %174 : vector<8x32xf32>
    %cst_80 = arith.constant 1.000000e+00 : f32
    %176 = vector.broadcast %cst_80 : f32 to vector<8x32xf32>
    %177 = arith.addf %176, %175 : vector<8x32xf32>
    %178 = arith.divf %176, %177 : vector<8x32xf32>
    %179 = vector.extract_strided_slice %164 {offsets = [0, 32], sizes = [8, 32], strides = [1, 1]} : vector<8x96xf32> to vector<8x32xf32>
    %180 = vector.extract_strided_slice %170 {offsets = [0, 32], sizes = [8, 32], strides = [1, 1]} : vector<8x96xf32> to vector<8x32xf32>
    %181 = arith.addf %179, %180 : vector<8x32xf32>
    %182 = arith.negf %181 : vector<8x32xf32>
    %183 = math.exp %182 : vector<8x32xf32>
    %cst_81 = arith.constant 1.000000e+00 : f32
    %184 = vector.broadcast %cst_81 : f32 to vector<8x32xf32>
    %185 = arith.addf %184, %183 : vector<8x32xf32>
    %186 = arith.divf %184, %185 : vector<8x32xf32>
    %187 = vector.extract_strided_slice %164 {offsets = [0, 64], sizes = [8, 32], strides = [1, 1]} : vector<8x96xf32> to vector<8x32xf32>
    %188 = vector.extract_strided_slice %170 {offsets = [0, 64], sizes = [8, 32], strides = [1, 1]} : vector<8x96xf32> to vector<8x32xf32>
    %189 = arith.mulf %178, %188 : vector<8x32xf32>
    %190 = arith.addf %187, %189 : vector<8x32xf32>
    %191 = math.tanh %190 : vector<8x32xf32>
    %cst_82 = arith.constant 1.000000e+00 : f32
    %192 = vector.broadcast %cst_82 : f32 to vector<8x32xf32>
    %193 = arith.subf %192, %186 : vector<8x32xf32>
    %194 = arith.mulf %193, %191 : vector<8x32xf32>
    %195 = arith.mulf %186, %165 : vector<8x32xf32>
    %196 = arith.addf %194, %195 : vector<8x32xf32>
    %c0_83 = arith.constant 0 : index
    %c0_84 = arith.constant 0 : index
    %197 = vector.load %arg17[%c0_83, %c0_84] : memref<8x32xf32, #tpu.memory_space<vmem>>, vector<8x32xf32>
    tpu.vector_store %arg17[%c0_83, %c0_84], %196 {strides = array<i32>} : memref<8x32xf32, #tpu.memory_space<vmem>>, vector<8x32xf32>,
    %198 = arith.index_cast %160 : i32 to index
    %199 = memref.load %arg0[%198] : memref<4xi32, #tpu.memory_space<smem>>
    %c1_i32_85 = arith.constant 1 : i32
    %200 = arith.subi %199, %c1_i32_85 : i32
    %201 = vector.broadcast %200 : i32 to vector<1x8xi32>
    %202 = arith.cmpi eq, %17, %201 : vector<1x8xi32>
    %203 = arith.extui %202 : vector<1x8xi1> to vector<1x8xi32>
    %204 = arith.sitofp %203 : vector<1x8xi32> to vector<1x8xf32>
    %cst_86 = arith.constant dense<0.000000e+00> : vector<1x32xf32>
    %205 = tpu.matmul %204, %196, %cst_86 {dimension_numbers = #tpu.dot_dimension_numbers<[1], [0], [0], [1], [0, 0, 1, 1], [], []>} : vector<1x8xf32>, vector<8x32xf32>, vector<1x32xf32> -> vector<1x32xf32>
    %206 = arith.index_cast %160 : i32 to index
    %c0_87 = arith.constant 0 : index
    %207 = vector.load %arg19[%206, %c0_87] : memref<4x32xf32, #tpu.memory_space<vmem>>, vector<1x32xf32>
    tpu.vector_store %arg19[%206, %c0_87], %205 {strides = array<i32>} : memref<4x32xf32, #tpu.memory_space<vmem>>, vector<1x32xf32>,
    %c2_i32 = arith.constant 2 : i32
    %c8_i32_88 = arith.constant 8 : i32
    %208 = arith.muli %c2_i32, %c8_i32_88 : i32
    %209 = tpu.assume_multiple %208, 8 : i32
    %210 = arith.index_cast %209 : i32 to index
    %c0_89 = arith.constant 0 : index
    %211 = vector.load %arg14[%210, %c0_89] : memref<32x96xf32, #tpu.memory_space<vmem>>, vector<8x96xf32>
    %c0_90 = arith.constant 0 : index
    %c0_91 = arith.constant 0 : index
    %212 = vector.load %arg16[%c0_90, %c0_91] : memref<8x32xf32, #tpu.memory_space<vmem>>, vector<8x32xf32>
    %c0_92 = arith.constant 0 : index
    %c0_93 = arith.constant 0 : index
    %213 = vector.load %arg3[%c0_92, %c0_93] : memref<32x96xf32, #tpu.memory_space<vmem>>, vector<32x96xf32>
    %cst_94 = arith.constant dense<0.000000e+00> : vector<8x96xf32>
    %214 = tpu.matmul %212, %213, %cst_94 {dimension_numbers = #tpu.dot_dimension_numbers<[1], [0], [0], [1], [0, 0, 1, 1], [], []>} : vector<8x32xf32>, vector<32x96xf32>, vector<8x96xf32> -> vector<8x96xf32>
    %c0_95 = arith.constant 0 : index
    %c0_96 = arith.constant 0 : index
    %215 = vector.load %arg5[%c0_95, %c0_96] : memref<1x96xf32, #tpu.memory_space<vmem>>, vector<1x96xf32>
    %216 = vector.broadcast %215 : vector<1x96xf32> to vector<8x96xf32>
    %217 = arith.addf %214, %216 : vector<8x96xf32>
    %218 = vector.extract_strided_slice %211 {offsets = [0, 0], sizes = [8, 32], strides = [1, 1]} : vector<8x96xf32> to vector<8x32xf32>
    %219 = vector.extract_strided_slice %217 {offsets = [0, 0], sizes = [8, 32], strides = [1, 1]} : vector<8x96xf32> to vector<8x32xf32>
    %220 = arith.addf %218, %219 : vector<8x32xf32>
    %221 = arith.negf %220 : vector<8x32xf32>
    %222 = math.exp %221 : vector<8x32xf32>
    %cst_97 = arith.constant 1.000000e+00 : f32
    %223 = vector.broadcast %cst_97 : f32 to vector<8x32xf32>
    %224 = arith.addf %223, %222 : vector<8x32xf32>
    %225 = arith.divf %223, %224 : vector<8x32xf32>
    %226 = vector.extract_strided_slice %211 {offsets = [0, 32], sizes = [8, 32], strides = [1, 1]} : vector<8x96xf32> to vector<8x32xf32>
    %227 = vector.extract_strided_slice %217 {offsets = [0, 32], sizes = [8, 32], strides = [1, 1]} : vector<8x96xf32> to vector<8x32xf32>
    %228 = arith.addf %226, %227 : vector<8x32xf32>
    %229 = arith.negf %228 : vector<8x32xf32>
    %230 = math.exp %229 : vector<8x32xf32>
    %cst_98 = arith.constant 1.000000e+00 : f32
    %231 = vector.broadcast %cst_98 : f32 to vector<8x32xf32>
    %232 = arith.addf %231, %230 : vector<8x32xf32>
    %233 = arith.divf %231, %232 : vector<8x32xf32>
    %234 = vector.extract_strided_slice %211 {offsets = [0, 64], sizes = [8, 32], strides = [1, 1]} : vector<8x96xf32> to vector<8x32xf32>
    %235 = vector.extract_strided_slice %217 {offsets = [0, 64], sizes = [8, 32], strides = [1, 1]} : vector<8x96xf32> to vector<8x32xf32>
    %236 = arith.mulf %225, %235 : vector<8x32xf32>
    %237 = arith.addf %234, %236 : vector<8x32xf32>
    %238 = math.tanh %237 : vector<8x32xf32>
    %cst_99 = arith.constant 1.000000e+00 : f32
    %239 = vector.broadcast %cst_99 : f32 to vector<8x32xf32>
    %240 = arith.subf %239, %233 : vector<8x32xf32>
    %241 = arith.mulf %240, %238 : vector<8x32xf32>
    %242 = arith.mulf %233, %212 : vector<8x32xf32>
    %243 = arith.addf %241, %242 : vector<8x32xf32>
    %c0_100 = arith.constant 0 : index
    %c0_101 = arith.constant 0 : index
    %244 = vector.load %arg16[%c0_100, %c0_101] : memref<8x32xf32, #tpu.memory_space<vmem>>, vector<8x32xf32>
    tpu.vector_store %arg16[%c0_100, %c0_101], %243 {strides = array<i32>} : memref<8x32xf32, #tpu.memory_space<vmem>>, vector<8x32xf32>,
    %245 = arith.index_cast %c2_i32 : i32 to index
    %246 = memref.load %arg0[%245] : memref<4xi32, #tpu.memory_space<smem>>
    %c1_i32_102 = arith.constant 1 : i32
    %247 = arith.subi %246, %c1_i32_102 : i32
    %248 = vector.broadcast %247 : i32 to vector<1x8xi32>
    %249 = arith.cmpi eq, %17, %248 : vector<1x8xi32>
    %250 = arith.extui %249 : vector<1x8xi1> to vector<1x8xi32>
    %251 = arith.sitofp %250 : vector<1x8xi32> to vector<1x8xf32>
    %cst_103 = arith.constant dense<0.000000e+00> : vector<1x32xf32>
    %252 = tpu.matmul %251, %243, %cst_103 {dimension_numbers = #tpu.dot_dimension_numbers<[1], [0], [0], [1], [0, 0, 1, 1], [], []>} : vector<1x8xf32>, vector<8x32xf32>, vector<1x32xf32> -> vector<1x32xf32>
    %253 = arith.index_cast %c2_i32 : i32 to index
    %c0_104 = arith.constant 0 : index
    %254 = vector.load %arg18[%253, %c0_104] : memref<4x32xf32, #tpu.memory_space<vmem>>, vector<1x32xf32>
    tpu.vector_store %arg18[%253, %c0_104], %252 {strides = array<i32>} : memref<4x32xf32, #tpu.memory_space<vmem>>, vector<1x32xf32>,
    %c3_i32_105 = arith.constant 3 : i32
    %255 = arith.subi %c3_i32_105, %c2_i32 : i32
    %c8_i32_106 = arith.constant 8 : i32
    %256 = arith.muli %255, %c8_i32_106 : i32
    %257 = tpu.assume_multiple %256, 8 : i32
    %258 = arith.index_cast %257 : i32 to index
    %c0_107 = arith.constant 0 : index
    %259 = vector.load %arg15[%258, %c0_107] : memref<32x96xf32, #tpu.memory_space<vmem>>, vector<8x96xf32>
    %c0_108 = arith.constant 0 : index
    %c0_109 = arith.constant 0 : index
    %260 = vector.load %arg17[%c0_108, %c0_109] : memref<8x32xf32, #tpu.memory_space<vmem>>, vector<8x32xf32>
    %c0_110 = arith.constant 0 : index
    %c0_111 = arith.constant 0 : index
    %261 = vector.load %arg7[%c0_110, %c0_111] : memref<32x96xf32, #tpu.memory_space<vmem>>, vector<32x96xf32>
    %cst_112 = arith.constant dense<0.000000e+00> : vector<8x96xf32>
    %262 = tpu.matmul %260, %261, %cst_112 {dimension_numbers = #tpu.dot_dimension_numbers<[1], [0], [0], [1], [0, 0, 1, 1], [], []>} : vector<8x32xf32>, vector<32x96xf32>, vector<8x96xf32> -> vector<8x96xf32>
    %c0_113 = arith.constant 0 : index
    %c0_114 = arith.constant 0 : index
    %263 = vector.load %arg9[%c0_113, %c0_114] : memref<1x96xf32, #tpu.memory_space<vmem>>, vector<1x96xf32>
    %264 = vector.broadcast %263 : vector<1x96xf32> to vector<8x96xf32>
    %265 = arith.addf %262, %264 : vector<8x96xf32>
    %266 = vector.extract_strided_slice %259 {offsets = [0, 0], sizes = [8, 32], strides = [1, 1]} : vector<8x96xf32> to vector<8x32xf32>
    %267 = vector.extract_strided_slice %265 {offsets = [0, 0], sizes = [8, 32], strides = [1, 1]} : vector<8x96xf32> to vector<8x32xf32>
    %268 = arith.addf %266, %267 : vector<8x32xf32>
    %269 = arith.negf %268 : vector<8x32xf32>
    %270 = math.exp %269 : vector<8x32xf32>
    %cst_115 = arith.constant 1.000000e+00 : f32
    %271 = vector.broadcast %cst_115 : f32 to vector<8x32xf32>
    %272 = arith.addf %271, %270 : vector<8x32xf32>
    %273 = arith.divf %271, %272 : vector<8x32xf32>
    %274 = vector.extract_strided_slice %259 {offsets = [0, 32], sizes = [8, 32], strides = [1, 1]} : vector<8x96xf32> to vector<8x32xf32>
    %275 = vector.extract_strided_slice %265 {offsets = [0, 32], sizes = [8, 32], strides = [1, 1]} : vector<8x96xf32> to vector<8x32xf32>
    %276 = arith.addf %274, %275 : vector<8x32xf32>
    %277 = arith.negf %276 : vector<8x32xf32>
    %278 = math.exp %277 : vector<8x32xf32>
    %cst_116 = arith.constant 1.000000e+00 : f32
    %279 = vector.broadcast %cst_116 : f32 to vector<8x32xf32>
    %280 = arith.addf %279, %278 : vector<8x32xf32>
    %281 = arith.divf %279, %280 : vector<8x32xf32>
    %282 = vector.extract_strided_slice %259 {offsets = [0, 64], sizes = [8, 32], strides = [1, 1]} : vector<8x96xf32> to vector<8x32xf32>
    %283 = vector.extract_strided_slice %265 {offsets = [0, 64], sizes = [8, 32], strides = [1, 1]} : vector<8x96xf32> to vector<8x32xf32>
    %284 = arith.mulf %273, %283 : vector<8x32xf32>
    %285 = arith.addf %282, %284 : vector<8x32xf32>
    %286 = math.tanh %285 : vector<8x32xf32>
    %cst_117 = arith.constant 1.000000e+00 : f32
    %287 = vector.broadcast %cst_117 : f32 to vector<8x32xf32>
    %288 = arith.subf %287, %281 : vector<8x32xf32>
    %289 = arith.mulf %288, %286 : vector<8x32xf32>
    %290 = arith.mulf %281, %260 : vector<8x32xf32>
    %291 = arith.addf %289, %290 : vector<8x32xf32>
    %c0_118 = arith.constant 0 : index
    %c0_119 = arith.constant 0 : index
    %292 = vector.load %arg17[%c0_118, %c0_119] : memref<8x32xf32, #tpu.memory_space<vmem>>, vector<8x32xf32>
    tpu.vector_store %arg17[%c0_118, %c0_119], %291 {strides = array<i32>} : memref<8x32xf32, #tpu.memory_space<vmem>>, vector<8x32xf32>,
    %293 = arith.index_cast %255 : i32 to index
    %294 = memref.load %arg0[%293] : memref<4xi32, #tpu.memory_space<smem>>
    %c1_i32_120 = arith.constant 1 : i32
    %295 = arith.subi %294, %c1_i32_120 : i32
    %296 = vector.broadcast %295 : i32 to vector<1x8xi32>
    %297 = arith.cmpi eq, %17, %296 : vector<1x8xi32>
    %298 = arith.extui %297 : vector<1x8xi1> to vector<1x8xi32>
    %299 = arith.sitofp %298 : vector<1x8xi32> to vector<1x8xf32>
    %cst_121 = arith.constant dense<0.000000e+00> : vector<1x32xf32>
    %300 = tpu.matmul %299, %291, %cst_121 {dimension_numbers = #tpu.dot_dimension_numbers<[1], [0], [0], [1], [0, 0, 1, 1], [], []>} : vector<1x8xf32>, vector<8x32xf32>, vector<1x32xf32> -> vector<1x32xf32>
    %301 = arith.index_cast %255 : i32 to index
    %c0_122 = arith.constant 0 : index
    %302 = vector.load %arg19[%301, %c0_122] : memref<4x32xf32, #tpu.memory_space<vmem>>, vector<1x32xf32>
    tpu.vector_store %arg19[%301, %c0_122], %300 {strides = array<i32>} : memref<4x32xf32, #tpu.memory_space<vmem>>, vector<1x32xf32>,
    %c3_i32_123 = arith.constant 3 : i32
    %c8_i32_124 = arith.constant 8 : i32
    %303 = arith.muli %c3_i32_123, %c8_i32_124 : i32
    %304 = tpu.assume_multiple %303, 8 : i32
    %305 = arith.index_cast %304 : i32 to index
    %c0_125 = arith.constant 0 : index
    %306 = vector.load %arg14[%305, %c0_125] : memref<32x96xf32, #tpu.memory_space<vmem>>, vector<8x96xf32>
    %c0_126 = arith.constant 0 : index
    %c0_127 = arith.constant 0 : index
    %307 = vector.load %arg16[%c0_126, %c0_127] : memref<8x32xf32, #tpu.memory_space<vmem>>, vector<8x32xf32>
    %c0_128 = arith.constant 0 : index
    %c0_129 = arith.constant 0 : index
    %308 = vector.load %arg3[%c0_128, %c0_129] : memref<32x96xf32, #tpu.memory_space<vmem>>, vector<32x96xf32>
    %cst_130 = arith.constant dense<0.000000e+00> : vector<8x96xf32>
    %309 = tpu.matmul %307, %308, %cst_130 {dimension_numbers = #tpu.dot_dimension_numbers<[1], [0], [0], [1], [0, 0, 1, 1], [], []>} : vector<8x32xf32>, vector<32x96xf32>, vector<8x96xf32> -> vector<8x96xf32>
    %c0_131 = arith.constant 0 : index
    %c0_132 = arith.constant 0 : index
    %310 = vector.load %arg5[%c0_131, %c0_132] : memref<1x96xf32, #tpu.memory_space<vmem>>, vector<1x96xf32>
    %311 = vector.broadcast %310 : vector<1x96xf32> to vector<8x96xf32>
    %312 = arith.addf %309, %311 : vector<8x96xf32>
    %313 = vector.extract_strided_slice %306 {offsets = [0, 0], sizes = [8, 32], strides = [1, 1]} : vector<8x96xf32> to vector<8x32xf32>
    %314 = vector.extract_strided_slice %312 {offsets = [0, 0], sizes = [8, 32], strides = [1, 1]} : vector<8x96xf32> to vector<8x32xf32>
    %315 = arith.addf %313, %314 : vector<8x32xf32>
    %316 = arith.negf %315 : vector<8x32xf32>
    %317 = math.exp %316 : vector<8x32xf32>
    %cst_133 = arith.constant 1.000000e+00 : f32
    %318 = vector.broadcast %cst_133 : f32 to vector<8x32xf32>
    %319 = arith.addf %318, %317 : vector<8x32xf32>
    %320 = arith.divf %318, %319 : vector<8x32xf32>
    %321 = vector.extract_strided_slice %306 {offsets = [0, 32], sizes = [8, 32], strides = [1, 1]} : vector<8x96xf32> to vector<8x32xf32>
    %322 = vector.extract_strided_slice %312 {offsets = [0, 32], sizes = [8, 32], strides = [1, 1]} : vector<8x96xf32> to vector<8x32xf32>
    %323 = arith.addf %321, %322 : vector<8x32xf32>
    %324 = arith.negf %323 : vector<8x32xf32>
    %325 = math.exp %324 : vector<8x32xf32>
    %cst_134 = arith.constant 1.000000e+00 : f32
    %326 = vector.broadcast %cst_134 : f32 to vector<8x32xf32>
    %327 = arith.addf %326, %325 : vector<8x32xf32>
    %328 = arith.divf %326, %327 : vector<8x32xf32>
    %329 = vector.extract_strided_slice %306 {offsets = [0, 64], sizes = [8, 32], strides = [1, 1]} : vector<8x96xf32> to vector<8x32xf32>
    %330 = vector.extract_strided_slice %312 {offsets = [0, 64], sizes = [8, 32], strides = [1, 1]} : vector<8x96xf32> to vector<8x32xf32>
    %331 = arith.mulf %320, %330 : vector<8x32xf32>
    %332 = arith.addf %329, %331 : vector<8x32xf32>
    %333 = math.tanh %332 : vector<8x32xf32>
    %cst_135 = arith.constant 1.000000e+00 : f32
    %334 = vector.broadcast %cst_135 : f32 to vector<8x32xf32>
    %335 = arith.subf %334, %328 : vector<8x32xf32>
    %336 = arith.mulf %335, %333 : vector<8x32xf32>
    %337 = arith.mulf %328, %307 : vector<8x32xf32>
    %338 = arith.addf %336, %337 : vector<8x32xf32>
    %c0_136 = arith.constant 0 : index
    %c0_137 = arith.constant 0 : index
    %339 = vector.load %arg16[%c0_136, %c0_137] : memref<8x32xf32, #tpu.memory_space<vmem>>, vector<8x32xf32>
    tpu.vector_store %arg16[%c0_136, %c0_137], %338 {strides = array<i32>} : memref<8x32xf32, #tpu.memory_space<vmem>>, vector<8x32xf32>,
    %340 = arith.index_cast %c3_i32_123 : i32 to index
    %341 = memref.load %arg0[%340] : memref<4xi32, #tpu.memory_space<smem>>
    %c1_i32_138 = arith.constant 1 : i32
    %342 = arith.subi %341, %c1_i32_138 : i32
    %343 = vector.broadcast %342 : i32 to vector<1x8xi32>
    %344 = arith.cmpi eq, %17, %343 : vector<1x8xi32>
    %345 = arith.extui %344 : vector<1x8xi1> to vector<1x8xi32>
    %346 = arith.sitofp %345 : vector<1x8xi32> to vector<1x8xf32>
    %cst_139 = arith.constant dense<0.000000e+00> : vector<1x32xf32>
    %347 = tpu.matmul %346, %338, %cst_139 {dimension_numbers = #tpu.dot_dimension_numbers<[1], [0], [0], [1], [0, 0, 1, 1], [], []>} : vector<1x8xf32>, vector<8x32xf32>, vector<1x32xf32> -> vector<1x32xf32>
    %348 = arith.index_cast %c3_i32_123 : i32 to index
    %c0_140 = arith.constant 0 : index
    %349 = vector.load %arg18[%348, %c0_140] : memref<4x32xf32, #tpu.memory_space<vmem>>, vector<1x32xf32>
    tpu.vector_store %arg18[%348, %c0_140], %347 {strides = array<i32>} : memref<4x32xf32, #tpu.memory_space<vmem>>, vector<1x32xf32>,
    %c3_i32_141 = arith.constant 3 : i32
    %350 = arith.subi %c3_i32_141, %c3_i32_123 : i32
    %c8_i32_142 = arith.constant 8 : i32
    %351 = arith.muli %350, %c8_i32_142 : i32
    %352 = tpu.assume_multiple %351, 8 : i32
    %353 = arith.index_cast %352 : i32 to index
    %c0_143 = arith.constant 0 : index
    %354 = vector.load %arg15[%353, %c0_143] : memref<32x96xf32, #tpu.memory_space<vmem>>, vector<8x96xf32>
    %c0_144 = arith.constant 0 : index
    %c0_145 = arith.constant 0 : index
    %355 = vector.load %arg17[%c0_144, %c0_145] : memref<8x32xf32, #tpu.memory_space<vmem>>, vector<8x32xf32>
    %c0_146 = arith.constant 0 : index
    %c0_147 = arith.constant 0 : index
    %356 = vector.load %arg7[%c0_146, %c0_147] : memref<32x96xf32, #tpu.memory_space<vmem>>, vector<32x96xf32>
    %cst_148 = arith.constant dense<0.000000e+00> : vector<8x96xf32>
    %357 = tpu.matmul %355, %356, %cst_148 {dimension_numbers = #tpu.dot_dimension_numbers<[1], [0], [0], [1], [0, 0, 1, 1], [], []>} : vector<8x32xf32>, vector<32x96xf32>, vector<8x96xf32> -> vector<8x96xf32>
    %c0_149 = arith.constant 0 : index
    %c0_150 = arith.constant 0 : index
    %358 = vector.load %arg9[%c0_149, %c0_150] : memref<1x96xf32, #tpu.memory_space<vmem>>, vector<1x96xf32>
    %359 = vector.broadcast %358 : vector<1x96xf32> to vector<8x96xf32>
    %360 = arith.addf %357, %359 : vector<8x96xf32>
    %361 = vector.extract_strided_slice %354 {offsets = [0, 0], sizes = [8, 32], strides = [1, 1]} : vector<8x96xf32> to vector<8x32xf32>
    %362 = vector.extract_strided_slice %360 {offsets = [0, 0], sizes = [8, 32], strides = [1, 1]} : vector<8x96xf32> to vector<8x32xf32>
    %363 = arith.addf %361, %362 : vector<8x32xf32>
    %364 = arith.negf %363 : vector<8x32xf32>
    %365 = math.exp %364 : vector<8x32xf32>
    %cst_151 = arith.constant 1.000000e+00 : f32
    %366 = vector.broadcast %cst_151 : f32 to vector<8x32xf32>
    %367 = arith.addf %366, %365 : vector<8x32xf32>
    %368 = arith.divf %366, %367 : vector<8x32xf32>
    %369 = vector.extract_strided_slice %354 {offsets = [0, 32], sizes = [8, 32], strides = [1, 1]} : vector<8x96xf32> to vector<8x32xf32>
    %370 = vector.extract_strided_slice %360 {offsets = [0, 32], sizes = [8, 32], strides = [1, 1]} : vector<8x96xf32> to vector<8x32xf32>
    %371 = arith.addf %369, %370 : vector<8x32xf32>
    %372 = arith.negf %371 : vector<8x32xf32>
    %373 = math.exp %372 : vector<8x32xf32>
    %cst_152 = arith.constant 1.000000e+00 : f32
    %374 = vector.broadcast %cst_152 : f32 to vector<8x32xf32>
    %375 = arith.addf %374, %373 : vector<8x32xf32>
    %376 = arith.divf %374, %375 : vector<8x32xf32>
    %377 = vector.extract_strided_slice %354 {offsets = [0, 64], sizes = [8, 32], strides = [1, 1]} : vector<8x96xf32> to vector<8x32xf32>
    %378 = vector.extract_strided_slice %360 {offsets = [0, 64], sizes = [8, 32], strides = [1, 1]} : vector<8x96xf32> to vector<8x32xf32>
    %379 = arith.mulf %368, %378 : vector<8x32xf32>
    %380 = arith.addf %377, %379 : vector<8x32xf32>
    %381 = math.tanh %380 : vector<8x32xf32>
    %cst_153 = arith.constant 1.000000e+00 : f32
    %382 = vector.broadcast %cst_153 : f32 to vector<8x32xf32>
    %383 = arith.subf %382, %376 : vector<8x32xf32>
    %384 = arith.mulf %383, %381 : vector<8x32xf32>
    %385 = arith.mulf %376, %355 : vector<8x32xf32>
    %386 = arith.addf %384, %385 : vector<8x32xf32>
    %c0_154 = arith.constant 0 : index
    %c0_155 = arith.constant 0 : index
    %387 = vector.load %arg17[%c0_154, %c0_155] : memref<8x32xf32, #tpu.memory_space<vmem>>, vector<8x32xf32>
    tpu.vector_store %arg17[%c0_154, %c0_155], %386 {strides = array<i32>} : memref<8x32xf32, #tpu.memory_space<vmem>>, vector<8x32xf32>,
    %388 = arith.index_cast %350 : i32 to index
    %389 = memref.load %arg0[%388] : memref<4xi32, #tpu.memory_space<smem>>
    %c1_i32_156 = arith.constant 1 : i32
    %390 = arith.subi %389, %c1_i32_156 : i32
    %391 = vector.broadcast %390 : i32 to vector<1x8xi32>
    %392 = arith.cmpi eq, %17, %391 : vector<1x8xi32>
    %393 = arith.extui %392 : vector<1x8xi1> to vector<1x8xi32>
    %394 = arith.sitofp %393 : vector<1x8xi32> to vector<1x8xf32>
    %cst_157 = arith.constant dense<0.000000e+00> : vector<1x32xf32>
    %395 = tpu.matmul %394, %386, %cst_157 {dimension_numbers = #tpu.dot_dimension_numbers<[1], [0], [0], [1], [0, 0, 1, 1], [], []>} : vector<1x8xf32>, vector<8x32xf32>, vector<1x32xf32> -> vector<1x32xf32>
    %396 = arith.index_cast %350 : i32 to index
    %c0_158 = arith.constant 0 : index
    %397 = vector.load %arg19[%396, %c0_158] : memref<4x32xf32, #tpu.memory_space<vmem>>, vector<1x32xf32>
    tpu.vector_store %arg19[%396, %c0_158], %395 {strides = array<i32>} : memref<4x32xf32, #tpu.memory_space<vmem>>, vector<1x32xf32>,
    %c4_i32 = arith.constant 4 : i32
    %c0_159 = arith.constant 0 : index
    %c0_160 = arith.constant 0 : index
    %398 = vector.load %arg18[%c0_159, %c0_160] : memref<4x32xf32, #tpu.memory_space<vmem>>, vector<4x32xf32>
    %c0_161 = arith.constant 0 : index
    %c0_162 = arith.constant 0 : index
    %399 = vector.load %arg10[%c0_161, %c0_162] : memref<32x128xf32, #tpu.memory_space<vmem>>, vector<32x128xf32>
    %cst_163 = arith.constant dense<0.000000e+00> : vector<4x128xf32>
    %400 = tpu.matmul %398, %399, %cst_163 {dimension_numbers = #tpu.dot_dimension_numbers<[1], [0], [0], [1], [0, 0, 1, 1], [], []>} : vector<4x32xf32>, vector<32x128xf32>, vector<4x128xf32> -> vector<4x128xf32>
    %c0_164 = arith.constant 0 : index
    %c0_165 = arith.constant 0 : index
    %401 = vector.load %arg19[%c0_164, %c0_165] : memref<4x32xf32, #tpu.memory_space<vmem>>, vector<4x32xf32>
    %c0_166 = arith.constant 0 : index
    %c0_167 = arith.constant 0 : index
    %402 = vector.load %arg11[%c0_166, %c0_167] : memref<32x128xf32, #tpu.memory_space<vmem>>, vector<32x128xf32>
    %cst_168 = arith.constant dense<0.000000e+00> : vector<4x128xf32>
    %403 = tpu.matmul %401, %402, %cst_168 {dimension_numbers = #tpu.dot_dimension_numbers<[1], [0], [0], [1], [0, 0, 1, 1], [], []>} : vector<4x32xf32>, vector<32x128xf32>, vector<4x128xf32> -> vector<4x128xf32>
    %404 = arith.addf %400, %403 : vector<4x128xf32>
    %c0_169 = arith.constant 0 : index
    %c0_170 = arith.constant 0 : index
    %405 = vector.load %arg12[%c0_169, %c0_170] : memref<1x128xf32, #tpu.memory_space<vmem>>, vector<1x128xf32>
    %406 = vector.broadcast %405 : vector<1x128xf32> to vector<4x128xf32>
    %407 = arith.addf %404, %406 : vector<4x128xf32>
    %c0_171 = arith.constant 0 : index
    %c0_172 = arith.constant 0 : index
    %408 = vector.load %arg13[%c0_171, %c0_172] : memref<4x128xf32, #tpu.memory_space<vmem>>, vector<4x128xf32>
    tpu.vector_store %arg13[%c0_171, %c0_172], %407 {strides = array<i32>} : memref<4x128xf32, #tpu.memory_space<vmem>>, vector<4x128xf32>,
    return
  }
}

</mosaic_0001>

<llo_original>
// kernel: tpu_custom_call.1
$region0: #{tpu_custom_call.1}
  #allocation0 [shape = 'u32[]', space=smem, size = 0x4, offset = 0x4, fixed_abs, tag = 'smem constant byte address 0x4 - core index']
  #allocation1 [shape = 'u32[72,128]{1,0:T(1,128)}', space=vmem, size = 0x9000, scoped, tag = 'internal scratch']
  #allocation2 [shape = 'f32[32,96]{1,0:T(8,128)}', space=vmem, size = 0x4000, scoped, tag = 'scratch operand']
  #allocation3 [shape = 'f32[32,96]{1,0:T(8,128)}', space=vmem, size = 0x4000, scoped, tag = 'scratch operand']
  #allocation4 [shape = 'f32[8,32]{1,0:T(8,128)}', space=vmem, size = 0x1000, scoped, tag = 'scratch operand']
  #allocation5 [shape = 'f32[8,32]{1,0:T(8,128)}', space=vmem, size = 0x1000, scoped, tag = 'scratch operand']
  #allocation6 [shape = 'f32[4,32]{1,0:T(4,128)}', space=vmem, size = 0x800, scoped, tag = 'scratch operand']
  #allocation7 [shape = 'f32[4,32]{1,0:T(4,128)}', space=vmem, size = 0x800, scoped, tag = 'scratch operand']
  %s0 = inlined_call_operand.hbm [shape: s32[4], index: 0, kind: input, shape index: {}]
  %s1 = inlined_call_operand.hbm [shape: f32[32,32], index: 1, kind: input, shape index: {}]
  %s2 = inlined_call_operand.hbm [shape: f32[32,96], index: 2, kind: input, shape index: {}]
  %s3 = inlined_call_operand.hbm [shape: f32[32,96], index: 3, kind: input, shape index: {}]
  %s4 = inlined_call_operand.vmem [shape: f32[1,96], index: 4, kind: input, shape index: {}]
  %s5 = inlined_call_operand.vmem [shape: f32[1,96], index: 5, kind: input, shape index: {}]
  %s6 = inlined_call_operand.hbm [shape: f32[32,96], index: 6, kind: input, shape index: {}]
  %s7 = inlined_call_operand.hbm [shape: f32[32,96], index: 7, kind: input, shape index: {}]
  %s8 = inlined_call_operand.vmem [shape: f32[1,96], index: 8, kind: input, shape index: {}]
  %s9 = inlined_call_operand.vmem [shape: f32[1,96], index: 9, kind: input, shape index: {}]
  %s10 = inlined_call_operand.hbm [shape: f32[32,128], index: 10, kind: input, shape index: {}]
  %s11 = inlined_call_operand.hbm [shape: f32[32,128], index: 11, kind: input, shape index: {}]
  %s12 = inlined_call_operand.vmem [shape: f32[1,128], index: 12, kind: input, shape index: {}]
  %s13 = inlined_call_operand.hbm [shape: f32[4,128], index: 13, kind: output, shape index: {}]
  %s14 = sld [smem:[#allocation0]]
  $region94: #{tpu_custom_call.1} parent=0
    _
  %s16 = ssub.s32 1, %s14
  %s17 = scalar_select 0, %s16, %s14
  $region1: #{tpu_custom_call.1} parent=0
    #allocation8 [shape = 'u8[512]{0}', space=smem, size = 0x200, scoped, tag = 'input window, operand 0, single buffered']
    #allocation9 [shape = 's32[1]{0}', space=sflag, size = 0x4, scoped, tag = 'scoped memory for tpu_custom_call.1']
    #allocation10 [shape = 's32[1]{0}', space=sflag, size = 0x4, scoped, tag = 'scoped memory for tpu_custom_call.1']
    #allocation11 [shape = 's32[1]{0}', space=sflag, size = 0x4, scoped, tag = 'scoped memory for tpu_custom_call.1']
    #allocation12 [shape = 'u8[16384]{0}', space=vmem, size = 0x4000, scoped, tag = 'input window, operand 1, single buffered']
    #allocation13 [shape = 'u8[16384]{0}', space=vmem, size = 0x4000, scoped, tag = 'input window, operand 2, single buffered']
    #allocation14 [shape = 's32[1]{0}', space=sflag, size = 0x4, scoped, tag = 'scoped memory for tpu_custom_call.1']
    #allocation15 [shape = 'u8[16384]{0}', space=vmem, size = 0x4000, scoped, tag = 'input window, operand 3, single buffered']
    #allocation16 [shape = 'u8[16384]{0}', space=vmem, size = 0x4000, scoped, tag = 'input window, operand 6, single buffered']
    #allocation17 [shape = 's32[1]{0}', space=sflag, size = 0x4, scoped, tag = 'scoped memory for tpu_custom_call.1']
    #allocation18 [shape = 'u8[16384]{0}', space=vmem, size = 0x4000, scoped, tag = 'input window, operand 7, single buffered']
    #allocation19 [shape = 'u8[16384]{0}', space=vmem, size = 0x4000, scoped, tag = 'input window, operand 10, single buffered']
    #allocation20 [shape = 's32[1]{0}', space=sflag, size = 0x4, scoped, tag = 'scoped memory for tpu_custom_call.1']
    #allocation21 [shape = 'u8[16384]{0}', space=vmem, size = 0x4000, scoped, tag = 'input window, operand 11, single buffered']
    #allocation22 [shape = 'u8[2048]{0}', space=vmem, size = 0x800, scoped, tag = 'output window, operand 0, single buffered']
    %18 = vsyncpa [#allocation11], 0
    %19 = vsyncpa [#allocation9], 0
    %20 = vsyncpa [#allocation14], 0
    %21 = vsyncpa [#allocation17], 0
    %22 = vsyncpa [#allocation20], 0
    %23 = vsyncpa [#allocation10], 0
    // Predicated region
    $region2: #{tpu_custom_call.1} parent=1 // pred_check
      _
    $region3: #{tpu_custom_call.1} parent=1 // pred_check_branch
      %25 = sbr.rel (0) target = $region5
    $region4: #{tpu_custom_call.1} parent=1 // pred_region
      %27 = vsyncadd [#allocation11], 0
      %s29 = sshll.u32 %s0, 4
      %s30 = int_to_ptr.hbm [resolvable:$true] %s29
      %32 = dma.hbm_to_smem %s30, 16, [#allocation8], [#allocation11]
    $region5: #{tpu_custom_call.1} parent=1 // pred_fallthru
      _
    // Predicated region
    $region6: #{tpu_custom_call.1} parent=1 // pred_check
      _
    $region7: #{tpu_custom_call.1} parent=1 // pred_check_branch
      %34 = sbr.rel (0) target = $region9
    $region8: #{tpu_custom_call.1} parent=1 // pred_region
      %36 = vsyncadd [#allocation9], 0
      %s37 = sshll.u32 %s1, 4
      %s38 = int_to_ptr.hbm [resolvable:$true] %s37
      %s39 = sshll.u32 [#allocation12], 4
      %s40 = int_to_ptr.vmem [resolvable:$true] %s39
      %45 = dma.hbm_to_vmem [thread:$0]  %s38, 512, %s40, [#allocation9], 128, 128, 8
    $region9: #{tpu_custom_call.1} parent=1 // pred_fallthru
      _
    // Predicated region
    $region10: #{tpu_custom_call.1} parent=1 // pred_check
      _
    $region11: #{tpu_custom_call.1} parent=1 // pred_check_branch
      %47 = sbr.rel (0) target = $region13
    $region12: #{tpu_custom_call.1} parent=1 // pred_region
      %49 = vsyncadd [#allocation14], 0
      %s50 = sshll.u32 %s2, 4
      %s51 = int_to_ptr.hbm [resolvable:$true] %s50
      %s52 = sshll.u32 [#allocation13], 4
      %s53 = int_to_ptr.vmem [resolvable:$true] %s52
      %58 = dma.hbm_to_vmem [thread:$0]  %s51, 512, %s53, [#allocation14], 128, 128, 8
    $region13: #{tpu_custom_call.1} parent=1 // pred_fallthru
      _
    // Predicated region
    $region14: #{tpu_custom_call.1} parent=1 // pred_check
      _
    $region15: #{tpu_custom_call.1} parent=1 // pred_check_branch
      %60 = sbr.rel (0) target = $region17
    $region16: #{tpu_custom_call.1} parent=1 // pred_region
      %62 = vsyncadd [#allocation14], 0
      %s63 = sshll.u32 %s3, 4
      %s64 = int_to_ptr.hbm [resolvable:$true] %s63
      %s65 = sshll.u32 [#allocation15], 4
      %s66 = int_to_ptr.vmem [resolvable:$true] %s65
      %71 = dma.hbm_to_vmem [thread:$0]  %s64, 512, %s66, [#allocation14], 128, 128, 8
    $region17: #{tpu_custom_call.1} parent=1 // pred_fallthru
      _
    // Predicated region
    $region18: #{tpu_custom_call.1} parent=1 // pred_check
      _
    $region19: #{tpu_custom_call.1} parent=1 // pred_check_branch
      %73 = sbr.rel (0) target = $region21
    $region20: #{tpu_custom_call.1} parent=1 // pred_region
      _
    $region21: #{tpu_custom_call.1} parent=1 // pred_fallthru
      _
    // Predicated region
    $region22: #{tpu_custom_call.1} parent=1 // pred_check
      _
    $region23: #{tpu_custom_call.1} parent=1 // pred_check_branch
      %75 = sbr.rel (0) target = $region25
    $region24: #{tpu_custom_call.1} parent=1 // pred_region
      _
    $region25: #{tpu_custom_call.1} parent=1 // pred_fallthru
      _
    // Predicated region
    $region26: #{tpu_custom_call.1} parent=1 // pred_check
      _
    $region27: #{tpu_custom_call.1} parent=1 // pred_check_branch
      %77 = sbr.rel (0) target = $region29
    $region28: #{tpu_custom_call.1} parent=1 // pred_region
      %79 = vsyncadd [#allocation17], 0
      %s80 = sshll.u32 %s6, 4
      %s81 = int_to_ptr.hbm [resolvable:$true] %s80
      %s82 = sshll.u32 [#allocation16], 4
      %s83 = int_to_ptr.vmem [resolvable:$true] %s82
      %88 = dma.hbm_to_vmem [thread:$0]  %s81, 512, %s83, [#allocation17], 128, 128, 8
    $region29: #{tpu_custom_call.1} parent=1 // pred_fallthru
      _
    // Predicated region
    $region30: #{tpu_custom_call.1} parent=1 // pred_check
      _
    $region31: #{tpu_custom_call.1} parent=1 // pred_check_branch
      %90 = sbr.rel (0) target = $region33
    $region32: #{tpu_custom_call.1} parent=1 // pred_region
      %92 = vsyncadd [#allocation17], 0
      %s93 = sshll.u32 %s7, 4
      %s94 = int_to_ptr.hbm [resolvable:$true] %s93
      %s95 = sshll.u32 [#allocation18], 4
      %s96 = int_to_ptr.vmem [resolvable:$true] %s95
      %101 = dma.hbm_to_vmem [thread:$0]  %s94, 512, %s96, [#allocation17], 128, 128, 8
    $region33: #{tpu_custom_call.1} parent=1 // pred_fallthru
      _
    // Predicated region
    $region34: #{tpu_custom_call.1} parent=1 // pred_check
      _
    $region35: #{tpu_custom_call.1} parent=1 // pred_check_branch
      %103 = sbr.rel (0) target = $region37
    $region36: #{tpu_custom_call.1} parent=1 // pred_region
      _
    $region37: #{tpu_custom_call.1} parent=1 // pred_fallthru
      _
    // Predicated region
    $region38: #{tpu_custom_call.1} parent=1 // pred_check
      _
    $region39: #{tpu_custom_call.1} parent=1 // pred_check_branch
      %105 = sbr.rel (0) target = $region41
    $region40: #{tpu_custom_call.1} parent=1 // pred_region
      _
    $region41: #{tpu_custom_call.1} parent=1 // pred_fallthru
      _
    // Predicated region
    $region42: #{tpu_custom_call.1} parent=1 // pred_check
      _
    $region43: #{tpu_custom_call.1} parent=1 // pred_check_branch
      %107 = sbr.rel (0) target = $region45
    $region44: #{tpu_custom_call.1} parent=1 // pred_region
      %109 = vsyncadd [#allocation20], 0
      %s110 = sshll.u32 %s10, 4
      %s111 = int_to_ptr.hbm [resolvable:$true] %s110
      %s112 = sshll.u32 [#allocation19], 4
      %s113 = int_to_ptr.vmem [resolvable:$true] %s112
      %118 = dma.hbm_to_vmem [thread:$0]  %s111, 512, %s113, [#allocation20], 128, 128, 8
    $region45: #{tpu_custom_call.1} parent=1 // pred_fallthru
      _
    // Predicated region
    $region46: #{tpu_custom_call.1} parent=1 // pred_check
      _
    $region47: #{tpu_custom_call.1} parent=1 // pred_check_branch
      %120 = sbr.rel (0) target = $region49
    $region48: #{tpu_custom_call.1} parent=1 // pred_region
      %122 = vsyncadd [#allocation20], 0
      %s123 = sshll.u32 %s11, 4
      %s124 = int_to_ptr.hbm [resolvable:$true] %s123
      %s125 = sshll.u32 [#allocation21], 4
      %s126 = int_to_ptr.vmem [resolvable:$true] %s125
      %131 = dma.hbm_to_vmem [thread:$0]  %s124, 512, %s126, [#allocation20], 128, 128, 8
    $region49: #{tpu_custom_call.1} parent=1 // pred_fallthru
      _
    // Predicated region
    $region50: #{tpu_custom_call.1} parent=1 // pred_check
      _
    $region51: #{tpu_custom_call.1} parent=1 // pred_check_branch
      %133 = sbr.rel (0) target = $region53
    $region52: #{tpu_custom_call.1} parent=1 // pred_region
      _
    $region53: #{tpu_custom_call.1} parent=1 // pred_fallthru
      _
    // Predicated region
    $region54: #{tpu_custom_call.1} parent=1 // pred_check
      _
    $region55: #{tpu_custom_call.1} parent=1 // pred_check_branch
      %135 = sbr.rel (0) target = $region57
    $region56: #{tpu_custom_call.1} parent=1 // pred_region
      %137 = dma.done [#allocation11], 16
    $region57: #{tpu_custom_call.1} parent=1 // pred_fallthru
      _
    // Predicated region
    $region58: #{tpu_custom_call.1} parent=1 // pred_check
      _
    $region59: #{tpu_custom_call.1} parent=1 // pred_check_branch
      %139 = sbr.rel (0) target = $region61
    $region60: #{tpu_custom_call.1} parent=1 // pred_region
      %141 = dma.done [#allocation9], 512
    $region61: #{tpu_custom_call.1} parent=1 // pred_fallthru
      _
    // Predicated region
    $region62: #{tpu_custom_call.1} parent=1 // pred_check
      _
    $region63: #{tpu_custom_call.1} parent=1 // pred_check_branch
      %143 = sbr.rel (0) target = $region65
    $region64: #{tpu_custom_call.1} parent=1 // pred_region
      %145 = dma.done [#allocation14], 512
    $region65: #{tpu_custom_call.1} parent=1 // pred_fallthru
      _
    // Predicated region
    $region66: #{tpu_custom_call.1} parent=1 // pred_check
      _
    $region67: #{tpu_custom_call.1} parent=1 // pred_check_branch
      %147 = sbr.rel (0) target = $region69
    $region68: #{tpu_custom_call.1} parent=1 // pred_region
      %149 = dma.done [#allocation14], 512
    $region69: #{tpu_custom_call.1} parent=1 // pred_fallthru
      _
    // Predicated region
    $region70: #{tpu_custom_call.1} parent=1 // pred_check
      _
    $region71: #{tpu_custom_call.1} parent=1 // pred_check_branch
      %151 = sbr.rel (0) target = $region73
    $region72: #{tpu_custom_call.1} parent=1 // pred_region
      %153 = dma.done [#allocation17], 512
    $region73: #{tpu_custom_call.1} parent=1 // pred_fallthru
      _
    // Predicated region
    $region74: #{tpu_custom_call.1} parent=1 // pred_check
      _
    $region75: #{tpu_custom_call.1} parent=1 // pred_check_branch
      %155 = sbr.rel (0) target = $region77
    $region76: #{tpu_custom_call.1} parent=1 // pred_region
      %157 = dma.done [#allocation17], 512
    $region77: #{tpu_custom_call.1} parent=1 // pred_fallthru
      _
    // Predicated region
    $region78: #{tpu_custom_call.1} parent=1 // pred_check
      _
    $region79: #{tpu_custom_call.1} parent=1 // pred_check_branch
      %159 = sbr.rel (0) target = $region81
    $region80: #{tpu_custom_call.1} parent=1 // pred_region
      %161 = dma.done [#allocation20], 512
    $region81: #{tpu_custom_call.1} parent=1 // pred_fallthru
      _
    // Predicated region
    $region82: #{tpu_custom_call.1} parent=1 // pred_check
      _
    $region83: #{tpu_custom_call.1} parent=1 // pred_check_branch
      %163 = sbr.rel (0) target = $region85
    $region84: #{tpu_custom_call.1} parent=1 // pred_region
      %165 = dma.done [#allocation20], 512
    $region85: #{tpu_custom_call.1} parent=1 // pred_fallthru
      _
    %166 = sfence
    %v167 = vld [vmem:[#allocation12] sm:$0xff]
    %v168 = vld [vmem:[#allocation12 + $0x8] sm:$0xff]
    %v169 = vld [vmem:[#allocation12 + $0x10] sm:$0xff]
    %v170 = vld [vmem:[#allocation12 + $0x18] sm:$0xff]
    %v171 = vld [vmem:[#allocation13] sm:$0xff]
    %v172 = vld [vmem:[#allocation13 + $0x8] sm:$0xff]
    %v173 = vld [vmem:[#allocation13 + $0x10] sm:$0xff]
    %v174 = vld [vmem:[#allocation13 + $0x18] sm:$0xff]
    %v175 = vld [vmem:[%s4] sm:$0x1]
    %v177 = vperm.slane %v175, 0
    %vm179 = vcmask 261120
    %v181 = vsel %vm179, %v167, 0
    %v184 = vsel %vm179, %v168, 0
    %v187 = vsel %vm179, %v169, 0
    %v190 = vsel %vm179, %v170, 0
    %192 = vmatpush.msra.mxu0 0.0
    %193 = vmatpush.msra.mxu0 0.0
    %194 = vmatpush.msra.mxu0 0.0
    %195 = vmatpush.msra.mxu0 0.0
    %196 = vmatpush.msra.mxu0 0.0
    %197 = vmatpush.msra.mxu0 0.0
    %198 = vmatpush.msra.mxu0 0.0
    %199 = vmatpush.msra.mxu0 0.0
    %200 = vmatpush.msra.mxu0 0.0
    %201 = vmatpush.msra.mxu0 0.0
    %202 = vmatpush.msra.mxu0 0.0
    %203 = vmatpush.msra.mxu0 0.0
    %204 = vmatpush.msra.mxu0 %v174
    %205 = vmatpush.msra.mxu0 %v173
    %206 = vmatpush.msra.mxu0 %v172
    %207 = vmatpush.msra.mxu0 %v171
    %208 = vmatmul.f32.gmra.mxu0 %v181
    %v209 = vpop.f32.mrf.mxu0
    %v210 = vadd.f32 %v177, %v209
    %211 = vmatmul.f32.gmra.mxu0 %v184
    %v212 = vpop.f32.mrf.mxu0
    %v213 = vadd.f32 %v177, %v212
    %214 = vmatmul.f32.gmra.mxu0 %v187
    %v215 = vpop.f32.mrf.mxu0
    %v216 = vadd.f32 %v177, %v215
    %217 = vmatmul.f32.gmra.mxu0 %v190
    %v218 = vpop.f32.mrf.mxu0
    %v219 = vadd.f32 %v177, %v218
    %220 = vdwg.mxu0
    %vm221 = vcmask 785408
    %222 = vst.msk [vmem:[#allocation2] sm:$0xff] %vm221, %v210
    %223 = vst.msk [vmem:[#allocation2 + $0x8] sm:$0xff] %vm221, %v213
    %224 = vst.msk [vmem:[#allocation2 + $0x10] sm:$0xff] %vm221, %v216
    %225 = vst.msk [vmem:[#allocation2 + $0x18] sm:$0xff] %vm221, %v219
    %v226 = vld [vmem:[#allocation16] sm:$0xff]
    %v227 = vld [vmem:[#allocation16 + $0x8] sm:$0xff]
    %v228 = vld [vmem:[#allocation16 + $0x10] sm:$0xff]
    %v229 = vld [vmem:[#allocation16 + $0x18] sm:$0xff]
    %v230 = vld [vmem:[%s8] sm:$0x1]
    %v232 = vperm.slane %v230, 0
    %234 = vmatpush.msra.mxu0 0.0
    %235 = vmatpush.msra.mxu0 0.0
    %236 = vmatpush.msra.mxu0 0.0
    %237 = vmatpush.msra.mxu0 0.0
    %238 = vmatpush.msra.mxu0 0.0
    %239 = vmatpush.msra.mxu0 0.0
    %240 = vmatpush.msra.mxu0 0.0
    %241 = vmatpush.msra.mxu0 0.0
    %242 = vmatpush.msra.mxu0 0.0
    %243 = vmatpush.msra.mxu0 0.0
    %244 = vmatpush.msra.mxu0 0.0
    %245 = vmatpush.msra.mxu0 0.0
    %246 = vmatpush.msra.mxu0 %v229
    %247 = vmatpush.msra.mxu0 %v228
    %248 = vmatpush.msra.mxu0 %v227
    %249 = vmatpush.msra.mxu0 %v226
    %250 = vmatmul.f32.gmra.mxu0 %v181
    %v251 = vpop.f32.mrf.mxu0
    %v252 = vadd.f32 %v232, %v251
    %253 = vmatmul.f32.gmra.mxu0 %v184
    %v254 = vpop.f32.mrf.mxu0
    %v255 = vadd.f32 %v232, %v254
    %256 = vmatmul.f32.gmra.mxu0 %v187
    %v257 = vpop.f32.mrf.mxu0
    %v258 = vadd.f32 %v232, %v257
    %259 = vmatmul.f32.gmra.mxu0 %v190
    %v260 = vpop.f32.mrf.mxu0
    %v261 = vadd.f32 %v232, %v260
    %262 = vdwg.mxu0
    %263 = vst.msk [vmem:[#allocation3] sm:$0xff] %vm221, %v252
    %264 = vst.msk [vmem:[#allocation3 + $0x8] sm:$0xff] %vm221, %v255
    %265 = vst.msk [vmem:[#allocation3 + $0x10] sm:$0xff] %vm221, %v258
    %266 = vst.msk [vmem:[#allocation3 + $0x18] sm:$0xff] %vm221, %v261
    %267 = vst.msk [vmem:[#allocation4] sm:$0xff] %vm179, 0.0
    %268 = vst.msk [vmem:[#allocation5] sm:$0xff] %vm179, 0.0
    %v269 = vlaneseq
    %v270 = vand.u32 %v269, 127
    %v271 = vld [vmem:[#allocation2] sm:$0xff]
    %v272 = vld [vmem:[#allocation4] sm:$0xff]
    %v273 = vld [vmem:[#allocation15] sm:$0xff]
    %v274 = vld [vmem:[#allocation15 + $0x8] sm:$0xff]
    %v275 = vld [vmem:[#allocation15 + $0x10] sm:$0xff]
    %v276 = vld [vmem:[#allocation15 + $0x18] sm:$0xff]
    %v277 = vld [vmem:[%s5] sm:$0x1]
    %v279 = vperm.slane %v277, 0
    %v282 = vsel %vm179, %v272, 0
    %284 = vmatpush.msra.mxu0 0.0
    %285 = vmatpush.msra.mxu0 0.0
    %286 = vmatpush.msra.mxu0 0.0
    %287 = vmatpush.msra.mxu0 0.0
    %288 = vmatpush.msra.mxu0 0.0
    %289 = vmatpush.msra.mxu0 0.0
    %290 = vmatpush.msra.mxu0 0.0
    %291 = vmatpush.msra.mxu0 0.0
    %292 = vmatpush.msra.mxu0 0.0
    %293 = vmatpush.msra.mxu0 0.0
    %294 = vmatpush.msra.mxu0 0.0
    %295 = vmatpush.msra.mxu0 0.0
    %296 = vmatpush.msra.mxu0 %v276
    %297 = vmatpush.msra.mxu0 %v275
    %298 = vmatpush.msra.mxu0 %v274
    %299 = vmatpush.msra.mxu0 %v273
    %300 = vmatmul.f32.gmra.mxu0 %v282
    %v301 = vpop.f32.mrf.mxu0
    %v302 = vadd.f32 %v279, %v301
    %303 = vdwg.mxu0
    %v304 = vadd.f32 %v271, %v302
    %v305 = vxor.u32 %v304, 2147483648
    %v306 = vmul.f32 %v305, 1.442695
    %v307 = vpow.pop %v306
    %v308 = vadd.f32 %v307, 1.0
    %v309 = vrcp.pop %v308
    %v310 = vmul.f32 %v308, %v309
    %v311 = vsub.f32 1.0, %v310
    %v312 = vmul.f32 %v309, %v311
    %v313 = vadd.f32 %v309, %v312
    %vm314 = vweird.f32 %v308
    %vm315 = vweird.f32 %v309
    %vm316 = vmor %vm314, %vm315
    %v317 = vsel %vm316, %v309, %v313
    %v318 = vand.u32 2147483647, %v308
    %vm319 = vcmp.eq.f32.partialorder %v318, 8.507059e+37
    %v320 = vand.u32 %v308, 2147483648
    %v321 = vor.u32 1.1754944e-38, %v320
    %v322 = vsel %vm319, %v321, %v317
    %v323 = vmul.f32 1.0, %v322
    %325 = vrot.lane.b32.xlu0 %v302, 64
    %v326 = vpop.permute.xlu0 %325
    %v328 = vmul.f32 %v323, %v326
    %330 = vrot.lane.b32.xlu0 %v328, 64
    %v331 = vpop.permute.xlu0 %330
    %v333 = vadd.f32 %v271, %v331
    %v334 = vtanh.pop %v333
    %v335 = vsub.f32 1.0, %v323
    %337 = vrot.lane.b32.xlu0 %v334, 96
    %v338 = vpop.permute.xlu0 %337
    %v340 = vmul.f32 %v335, %v338
    %341 = vrot.lane.b32.xlu0 %v272, 32
    %v342 = vpop.permute.xlu0 %341
    %v344 = vmul.f32 %v323, %v342
    %v345 = vadd.f32 %v340, %v344
    %347 = vrot.lane.b32.xlu0 %v345, 96
    %v348 = vpop.permute.xlu0 %347
    %350 = vst.msk [vmem:[#allocation4] sm:$0xff] %vm179, %v348
    %s351 = sld [smem:[#allocation8]]
    %s352 = ssub.s32 %s351, 1
    %v353 = vstv %s352
    %vm354 = vcmp.eq.s32.totalorder %v270, %v353
    %v355 = vsel %vm354, 1, 0
    %v356 = vcvt.s32.f32 %v355
    %vm357 = vcmask 64512
    %v359 = vsel %vm357, %v356, 0
    %361 = vmatpush.msra.mxu0 0.0
    %362 = vmatpush.msra.mxu0 0.0
    %363 = vmatpush.msra.mxu0 0.0
    %364 = vmatpush.msra.mxu0 0.0
    %365 = vmatpush.msra.mxu0 0.0
    %366 = vmatpush.msra.mxu0 0.0
    %367 = vmatpush.msra.mxu0 0.0
    %368 = vmatpush.msra.mxu0 0.0
    %369 = vmatpush.msra.mxu0 0.0
    %370 = vmatpush.msra.mxu0 0.0
    %371 = vmatpush.msra.mxu0 0.0
    %372 = vmatpush.msra.mxu0 0.0
    %373 = vmatpush.msra.mxu0 0.0
    %374 = vmatpush.msra.mxu0 0.0
    %375 = vmatpush.msra.mxu0 0.0
    %376 = vmatpush.msra.mxu0 %v348
    %377 = vmatmul.f32.gmra.mxu0 %v359
    %v378 = vpop.f32.mrf.mxu0
    %v379 = vadd.f32 0.0, %v378
    %380 = vdwg.mxu0
    %vm381 = vcmask 253952
    %382 = vst.msk [vmem:[#allocation6] sm:$0x1] %vm381, %v379
    %s383 = scalar_lea.vmem [#allocation3], 24
    %v384 = vld [vmem:[%s383] sm:$0xff]
    %v385 = vld [vmem:[#allocation5] sm:$0xff]
    %v386 = vld [vmem:[#allocation18] sm:$0xff]
    %v387 = vld [vmem:[#allocation18 + $0x8] sm:$0xff]
    %v388 = vld [vmem:[#allocation18 + $0x10] sm:$0xff]
    %v389 = vld [vmem:[#allocation18 + $0x18] sm:$0xff]
    %v390 = vld [vmem:[%s9] sm:$0x1]
    %v392 = vperm.slane %v390, 0
    %v395 = vsel %vm179, %v385, 0
    %397 = vmatpush.msra.mxu0 0.0
    %398 = vmatpush.msra.mxu0 0.0
    %399 = vmatpush.msra.mxu0 0.0
    %400 = vmatpush.msra.mxu0 0.0
    %401 = vmatpush.msra.mxu0 0.0
    %402 = vmatpush.msra.mxu0 0.0
    %403 = vmatpush.msra.mxu0 0.0
    %404 = vmatpush.msra.mxu0 0.0
    %405 = vmatpush.msra.mxu0 0.0
    %406 = vmatpush.msra.mxu0 0.0
    %407 = vmatpush.msra.mxu0 0.0
    %408 = vmatpush.msra.mxu0 0.0
    %409 = vmatpush.msra.mxu0 %v389
    %410 = vmatpush.msra.mxu0 %v388
    %411 = vmatpush.msra.mxu0 %v387
    %412 = vmatpush.msra.mxu0 %v386
    %413 = vmatmul.f32.gmra.mxu0 %v395
    %v414 = vpop.f32.mrf.mxu0
    %v415 = vadd.f32 %v392, %v414
    %416 = vdwg.mxu0
    %v417 = vadd.f32 %v384, %v415
    %v418 = vxor.u32 %v417, 2147483648
    %v419 = vmul.f32 %v418, 1.442695
    %v420 = vpow.pop %v419
    %v421 = vadd.f32 %v420, 1.0
    %v422 = vrcp.pop %v421
    %v423 = vmul.f32 %v421, %v422
    %v424 = vsub.f32 1.0, %v423
    %v425 = vmul.f32 %v422, %v424
    %v426 = vadd.f32 %v422, %v425
    %vm427 = vweird.f32 %v421
    %vm428 = vweird.f32 %v422
    %vm429 = vmor %vm427, %vm428
    %v430 = vsel %vm429, %v422, %v426
    %v431 = vand.u32 2147483647, %v421
    %vm432 = vcmp.eq.f32.partialorder %v431, 8.507059e+37
    %v433 = vand.u32 %v421, 2147483648
    %v434 = vor.u32 1.1754944e-38, %v433
    %v435 = vsel %vm432, %v434, %v430
    %v436 = vmul.f32 1.0, %v435
    %438 = vrot.lane.b32.xlu0 %v415, 64
    %v439 = vpop.permute.xlu0 %438
    %v441 = vmul.f32 %v436, %v439
    %443 = vrot.lane.b32.xlu0 %v441, 64
    %v444 = vpop.permute.xlu0 %443
    %v446 = vadd.f32 %v384, %v444
    %v447 = vtanh.pop %v446
    %v448 = vsub.f32 1.0, %v436
    %450 = vrot.lane.b32.xlu0 %v447, 96
    %v451 = vpop.permute.xlu0 %450
    %v453 = vmul.f32 %v448, %v451
    %454 = vrot.lane.b32.xlu0 %v385, 32
    %v455 = vpop.permute.xlu0 %454
    %v457 = vmul.f32 %v436, %v455
    %v458 = vadd.f32 %v453, %v457
    %460 = vrot.lane.b32.xlu0 %v458, 96
    %v461 = vpop.permute.xlu0 %460
    %463 = vst.msk [vmem:[#allocation5] sm:$0xff] %vm179, %v461
    %s464 = sld [smem:[#allocation8 + $0x3]]
    %s465 = ssub.s32 %s464, 1
    %v466 = vstv %s465
    %vm467 = vcmp.eq.s32.totalorder %v270, %v466
    %v468 = vsel %vm467, 1, 0
    %v469 = vcvt.s32.f32 %v468
    %v471 = vsel %vm357, %v469, 0
    %473 = vmatpush.msra.mxu0 0.0
    %474 = vmatpush.msra.mxu0 0.0
    %475 = vmatpush.msra.mxu0 0.0
    %476 = vmatpush.msra.mxu0 0.0
    %477 = vmatpush.msra.mxu0 0.0
    %478 = vmatpush.msra.mxu0 0.0
    %479 = vmatpush.msra.mxu0 0.0
    %480 = vmatpush.msra.mxu0 0.0
    %481 = vmatpush.msra.mxu0 0.0
    %482 = vmatpush.msra.mxu0 0.0
    %483 = vmatpush.msra.mxu0 0.0
    %484 = vmatpush.msra.mxu0 0.0
    %485 = vmatpush.msra.mxu0 0.0
    %486 = vmatpush.msra.mxu0 0.0
    %487 = vmatpush.msra.mxu0 0.0
    %488 = vmatpush.msra.mxu0 %v461
    %489 = vmatmul.f32.gmra.mxu0 %v471
    %v490 = vpop.f32.mrf.mxu0
    %v491 = vadd.f32 0.0, %v490
    %492 = vdwg.mxu0
    %493 = vst.msk [vmem:[#allocation7 + $0x3] sm:$0x1] %vm381, %v491
    %s494 = scalar_lea.vmem [#allocation2], 8
    %v495 = vld [vmem:[%s494] sm:$0xff]
    %v496 = vld [vmem:[#allocation4] sm:$0xff]
    %v497 = vld [vmem:[#allocation15] sm:$0xff]
    %v498 = vld [vmem:[#allocation15 + $0x8] sm:$0xff]
    %v499 = vld [vmem:[#allocation15 + $0x10] sm:$0xff]
    %v500 = vld [vmem:[#allocation15 + $0x18] sm:$0xff]
    %v501 = vld [vmem:[%s5] sm:$0x1]
    %v503 = vperm.slane %v501, 0
    %v506 = vsel %vm179, %v496, 0
    %508 = vmatpush.msra.mxu0 0.0
    %509 = vmatpush.msra.mxu0 0.0
    %510 = vmatpush.msra.mxu0 0.0
    %511 = vmatpush.msra.mxu0 0.0
    %512 = vmatpush.msra.mxu0 0.0
    %513 = vmatpush.msra.mxu0 0.0
    %514 = vmatpush.msra.mxu0 0.0
    %515 = vmatpush.msra.mxu0 0.0
    %516 = vmatpush.msra.mxu0 0.0
    %517 = vmatpush.msra.mxu0 0.0
    %518 = vmatpush.msra.mxu0 0.0
    %519 = vmatpush.msra.mxu0 0.0
    %520 = vmatpush.msra.mxu0 %v500
    %521 = vmatpush.msra.mxu0 %v499
    %522 = vmatpush.msra.mxu0 %v498
    %523 = vmatpush.msra.mxu0 %v497
    %524 = vmatmul.f32.gmra.mxu0 %v506
    %v525 = vpop.f32.mrf.mxu0
    %v526 = vadd.f32 %v503, %v525
    %527 = vdwg.mxu0
    %v528 = vadd.f32 %v495, %v526
    %v529 = vxor.u32 %v528, 2147483648
    %v530 = vmul.f32 %v529, 1.442695
    %v531 = vpow.pop %v530
    %v532 = vadd.f32 %v531, 1.0
    %v533 = vrcp.pop %v532
    %v534 = vmul.f32 %v532, %v533
    %v535 = vsub.f32 1.0, %v534
    %v536 = vmul.f32 %v533, %v535
    %v537 = vadd.f32 %v533, %v536
    %vm538 = vweird.f32 %v532
    %vm539 = vweird.f32 %v533
    %vm540 = vmor %vm538, %vm539
    %v541 = vsel %vm540, %v533, %v537
    %v542 = vand.u32 2147483647, %v532
    %vm543 = vcmp.eq.f32.partialorder %v542, 8.507059e+37
    %v544 = vand.u32 %v532, 2147483648
    %v545 = vor.u32 1.1754944e-38, %v544
    %v546 = vsel %vm543, %v545, %v541
    %v547 = vmul.f32 1.0, %v546
    %549 = vrot.lane.b32.xlu0 %v526, 64
    %v550 = vpop.permute.xlu0 %549
    %v552 = vmul.f32 %v547, %v550
    %554 = vrot.lane.b32.xlu0 %v552, 64
    %v555 = vpop.permute.xlu0 %554
    %v557 = vadd.f32 %v495, %v555
    %v558 = vtanh.pop %v557
    %v559 = vsub.f32 1.0, %v547
    %561 = vrot.lane.b32.xlu0 %v558, 96
    %v562 = vpop.permute.xlu0 %561
    %v564 = vmul.f32 %v559, %v562
    %565 = vrot.lane.b32.xlu0 %v496, 32
    %v566 = vpop.permute.xlu0 %565
    %v568 = vmul.f32 %v547, %v566
    %v569 = vadd.f32 %v564, %v568
    %571 = vrot.lane.b32.xlu0 %v569, 96
    %v572 = vpop.permute.xlu0 %571
    %574 = vst.msk [vmem:[#allocation4] sm:$0xff] %vm179, %v572
    %s575 = sld [smem:[#allocation8 + $0x1]]
    %s576 = ssub.s32 %s575, 1
    %v577 = vstv %s576
    %vm578 = vcmp.eq.s32.totalorder %v270, %v577
    %v579 = vsel %vm578, 1, 0
    %v580 = vcvt.s32.f32 %v579
    %v582 = vsel %vm357, %v580, 0
    %584 = vmatpush.msra.mxu0 0.0
    %585 = vmatpush.msra.mxu0 0.0
    %586 = vmatpush.msra.mxu0 0.0
    %587 = vmatpush.msra.mxu0 0.0
    %588 = vmatpush.msra.mxu0 0.0
    %589 = vmatpush.msra.mxu0 0.0
    %590 = vmatpush.msra.mxu0 0.0
    %591 = vmatpush.msra.mxu0 0.0
    %592 = vmatpush.msra.mxu0 0.0
    %593 = vmatpush.msra.mxu0 0.0
    %594 = vmatpush.msra.mxu0 0.0
    %595 = vmatpush.msra.mxu0 0.0
    %596 = vmatpush.msra.mxu0 0.0
    %597 = vmatpush.msra.mxu0 0.0
    %598 = vmatpush.msra.mxu0 0.0
    %599 = vmatpush.msra.mxu0 %v572
    %600 = vmatmul.f32.gmra.mxu0 %v582
    %v601 = vpop.f32.mrf.mxu0
    %v602 = vadd.f32 0.0, %v601
    %603 = vdwg.mxu0
    %604 = vst.msk [vmem:[#allocation6 + $0x1] sm:$0x1] %vm381, %v602
    %s605 = scalar_lea.vmem [#allocation3], 16
    %v606 = vld [vmem:[%s605] sm:$0xff]
    %v607 = vld [vmem:[#allocation5] sm:$0xff]
    %v608 = vld [vmem:[#allocation18] sm:$0xff]
    %v609 = vld [vmem:[#allocation18 + $0x8] sm:$0xff]
    %v610 = vld [vmem:[#allocation18 + $0x10] sm:$0xff]
    %v611 = vld [vmem:[#allocation18 + $0x18] sm:$0xff]
    %v612 = vld [vmem:[%s9] sm:$0x1]
    %v614 = vperm.slane %v612, 0
    %v617 = vsel %vm179, %v607, 0
    %619 = vmatpush.msra.mxu0 0.0
    %620 = vmatpush.msra.mxu0 0.0
    %621 = vmatpush.msra.mxu0 0.0
    %622 = vmatpush.msra.mxu0 0.0
    %623 = vmatpush.msra.mxu0 0.0
    %624 = vmatpush.msra.mxu0 0.0
    %625 = vmatpush.msra.mxu0 0.0
    %626 = vmatpush.msra.mxu0 0.0
    %627 = vmatpush.msra.mxu0 0.0
    %628 = vmatpush.msra.mxu0 0.0
    %629 = vmatpush.msra.mxu0 0.0
    %630 = vmatpush.msra.mxu0 0.0
    %631 = vmatpush.msra.mxu0 %v611
    %632 = vmatpush.msra.mxu0 %v610
    %633 = vmatpush.msra.mxu0 %v609
    %634 = vmatpush.msra.mxu0 %v608
    %635 = vmatmul.f32.gmra.mxu0 %v617
    %v636 = vpop.f32.mrf.mxu0
    %v637 = vadd.f32 %v614, %v636
    %638 = vdwg.mxu0
    %v639 = vadd.f32 %v606, %v637
    %v640 = vxor.u32 %v639, 2147483648
    %v641 = vmul.f32 %v640, 1.442695
    %v642 = vpow.pop %v641
    %v643 = vadd.f32 %v642, 1.0
    %v644 = vrcp.pop %v643
    %v645 = vmul.f32 %v643, %v644
    %v646 = vsub.f32 1.0, %v645
    %v647 = vmul.f32 %v644, %v646
    %v648 = vadd.f32 %v644, %v647
    %vm649 = vweird.f32 %v643
    %vm650 = vweird.f32 %v644
    %vm651 = vmor %vm649, %vm650
    %v652 = vsel %vm651, %v644, %v648
    %v653 = vand.u32 2147483647, %v643
    %vm654 = vcmp.eq.f32.partialorder %v653, 8.507059e+37
    %v655 = vand.u32 %v643, 2147483648
    %v656 = vor.u32 1.1754944e-38, %v655
    %v657 = vsel %vm654, %v656, %v652
    %v658 = vmul.f32 1.0, %v657
    %660 = vrot.lane.b32.xlu0 %v637, 64
    %v661 = vpop.permute.xlu0 %660
    %v663 = vmul.f32 %v658, %v661
    %665 = vrot.lane.b32.xlu0 %v663, 64
    %v666 = vpop.permute.xlu0 %665
    %v668 = vadd.f32 %v606, %v666
    %v669 = vtanh.pop %v668
    %v670 = vsub.f32 1.0, %v658
    %672 = vrot.lane.b32.xlu0 %v669, 96
    %v673 = vpop.permute.xlu0 %672
    %v675 = vmul.f32 %v670, %v673
    %676 = vrot.lane.b32.xlu0 %v607, 32
    %v677 = vpop.permute.xlu0 %676
    %v679 = vmul.f32 %v658, %v677
    %v680 = vadd.f32 %v675, %v679
    %682 = vrot.lane.b32.xlu0 %v680, 96
    %v683 = vpop.permute.xlu0 %682
    %685 = vst.msk [vmem:[#allocation5] sm:$0xff] %vm179, %v683
    %s686 = sld [smem:[#allocation8 + $0x2]]
    %s687 = ssub.s32 %s686, 1
    %v688 = vstv %s687
    %vm689 = vcmp.eq.s32.totalorder %v270, %v688
    %v690 = vsel %vm689, 1, 0
    %v691 = vcvt.s32.f32 %v690
    %v693 = vsel %vm357, %v691, 0
    %695 = vmatpush.msra.mxu0 0.0
    %696 = vmatpush.msra.mxu0 0.0
    %697 = vmatpush.msra.mxu0 0.0
    %698 = vmatpush.msra.mxu0 0.0
    %699 = vmatpush.msra.mxu0 0.0
    %700 = vmatpush.msra.mxu0 0.0
    %701 = vmatpush.msra.mxu0 0.0
    %702 = vmatpush.msra.mxu0 0.0
    %703 = vmatpush.msra.mxu0 0.0
    %704 = vmatpush.msra.mxu0 0.0
    %705 = vmatpush.msra.mxu0 0.0
    %706 = vmatpush.msra.mxu0 0.0
    %707 = vmatpush.msra.mxu0 0.0
    %708 = vmatpush.msra.mxu0 0.0
    %709 = vmatpush.msra.mxu0 0.0
    %710 = vmatpush.msra.mxu0 %v683
    %711 = vmatmul.f32.gmra.mxu0 %v693
    %v712 = vpop.f32.mrf.mxu0
    %v713 = vadd.f32 0.0, %v712
    %714 = vdwg.mxu0
    %715 = vst.msk [vmem:[#allocation7 + $0x2] sm:$0x1] %vm381, %v713
    %s716 = scalar_lea.vmem [#allocation2], 16
    %v717 = vld [vmem:[%s716] sm:$0xff]
    %v718 = vld [vmem:[#allocation4] sm:$0xff]
    %v719 = vld [vmem:[#allocation15] sm:$0xff]
    %v720 = vld [vmem:[#allocation15 + $0x8] sm:$0xff]
    %v721 = vld [vmem:[#allocation15 + $0x10] sm:$0xff]
    %v722 = vld [vmem:[#allocation15 + $0x18] sm:$0xff]
    %v723 = vld [vmem:[%s5] sm:$0x1]
    %v725 = vperm.slane %v723, 0
    %v728 = vsel %vm179, %v718, 0
    %730 = vmatpush.msra.mxu0 0.0
    %731 = vmatpush.msra.mxu0 0.0
    %732 = vmatpush.msra.mxu0 0.0
    %733 = vmatpush.msra.mxu0 0.0
    %734 = vmatpush.msra.mxu0 0.0
    %735 = vmatpush.msra.mxu0 0.0
    %736 = vmatpush.msra.mxu0 0.0
    %737 = vmatpush.msra.mxu0 0.0
    %738 = vmatpush.msra.mxu0 0.0
    %739 = vmatpush.msra.mxu0 0.0
    %740 = vmatpush.msra.mxu0 0.0
    %741 = vmatpush.msra.mxu0 0.0
    %742 = vmatpush.msra.mxu0 %v722
    %743 = vmatpush.msra.mxu0 %v721
    %744 = vmatpush.msra.mxu0 %v720
    %745 = vmatpush.msra.mxu0 %v719
    %746 = vmatmul.f32.gmra.mxu0 %v728
    %v747 = vpop.f32.mrf.mxu0
    %v748 = vadd.f32 %v725, %v747
    %749 = vdwg.mxu0
    %v750 = vadd.f32 %v717, %v748
    %v751 = vxor.u32 %v750, 2147483648
    %v752 = vmul.f32 %v751, 1.442695
    %v753 = vpow.pop %v752
    %v754 = vadd.f32 %v753, 1.0
    %v755 = vrcp.pop %v754
    %v756 = vmul.f32 %v754, %v755
    %v757 = vsub.f32 1.0, %v756
    %v758 = vmul.f32 %v755, %v757
    %v759 = vadd.f32 %v755, %v758
    %vm760 = vweird.f32 %v754
    %vm761 = vweird.f32 %v755
    %vm762 = vmor %vm760, %vm761
    %v763 = vsel %vm762, %v755, %v759
    %v764 = vand.u32 2147483647, %v754
    %vm765 = vcmp.eq.f32.partialorder %v764, 8.507059e+37
    %v766 = vand.u32 %v754, 2147483648
    %v767 = vor.u32 1.1754944e-38, %v766
    %v768 = vsel %vm765, %v767, %v763
    %v769 = vmul.f32 1.0, %v768
    %771 = vrot.lane.b32.xlu0 %v748, 64
    %v772 = vpop.permute.xlu0 %771
    %v774 = vmul.f32 %v769, %v772
    %776 = vrot.lane.b32.xlu0 %v774, 64
    %v777 = vpop.permute.xlu0 %776
    %v779 = vadd.f32 %v717, %v777
    %v780 = vtanh.pop %v779
    %v781 = vsub.f32 1.0, %v769
    %783 = vrot.lane.b32.xlu0 %v780, 96
    %v784 = vpop.permute.xlu0 %783
    %v786 = vmul.f32 %v781, %v784
    %787 = vrot.lane.b32.xlu0 %v718, 32
    %v788 = vpop.permute.xlu0 %787
    %v790 = vmul.f32 %v769, %v788
    %v791 = vadd.f32 %v786, %v790
    %793 = vrot.lane.b32.xlu0 %v791, 96
    %v794 = vpop.permute.xlu0 %793
    %796 = vst.msk [vmem:[#allocation4] sm:$0xff] %vm179, %v794
    %s797 = sld [smem:[#allocation8 + $0x2]]
    %s798 = ssub.s32 %s797, 1
    %v799 = vstv %s798
    %vm800 = vcmp.eq.s32.totalorder %v270, %v799
    %v801 = vsel %vm800, 1, 0
    %v802 = vcvt.s32.f32 %v801
    %v804 = vsel %vm357, %v802, 0
    %806 = vmatpush.msra.mxu0 0.0
    %807 = vmatpush.msra.mxu0 0.0
    %808 = vmatpush.msra.mxu0 0.0
    %809 = vmatpush.msra.mxu0 0.0
    %810 = vmatpush.msra.mxu0 0.0
    %811 = vmatpush.msra.mxu0 0.0
    %812 = vmatpush.msra.mxu0 0.0
    %813 = vmatpush.msra.mxu0 0.0
    %814 = vmatpush.msra.mxu0 0.0
    %815 = vmatpush.msra.mxu0 0.0
    %816 = vmatpush.msra.mxu0 0.0
    %817 = vmatpush.msra.mxu0 0.0
    %818 = vmatpush.msra.mxu0 0.0
    %819 = vmatpush.msra.mxu0 0.0
    %820 = vmatpush.msra.mxu0 0.0
    %821 = vmatpush.msra.mxu0 %v794
    %822 = vmatmul.f32.gmra.mxu0 %v804
    %v823 = vpop.f32.mrf.mxu0
    %v824 = vadd.f32 0.0, %v823
    %825 = vdwg.mxu0
    %826 = vst.msk [vmem:[#allocation6 + $0x2] sm:$0x1] %vm381, %v824
    %s827 = scalar_lea.vmem [#allocation3], 8
    %v828 = vld [vmem:[%s827] sm:$0xff]
    %v829 = vld [vmem:[#allocation5] sm:$0xff]
    %v830 = vld [vmem:[#allocation18] sm:$0xff]
    %v831 = vld [vmem:[#allocation18 + $0x8] sm:$0xff]
    %v832 = vld [vmem:[#allocation18 + $0x10] sm:$0xff]
    %v833 = vld [vmem:[#allocation18 + $0x18] sm:$0xff]
    %v834 = vld [vmem:[%s9] sm:$0x1]
    %v836 = vperm.slane %v834, 0
    %v839 = vsel %vm179, %v829, 0
    %841 = vmatpush.msra.mxu0 0.0
    %842 = vmatpush.msra.mxu0 0.0
    %843 = vmatpush.msra.mxu0 0.0
    %844 = vmatpush.msra.mxu0 0.0
    %845 = vmatpush.msra.mxu0 0.0
    %846 = vmatpush.msra.mxu0 0.0
    %847 = vmatpush.msra.mxu0 0.0
    %848 = vmatpush.msra.mxu0 0.0
    %849 = vmatpush.msra.mxu0 0.0
    %850 = vmatpush.msra.mxu0 0.0
    %851 = vmatpush.msra.mxu0 0.0
    %852 = vmatpush.msra.mxu0 0.0
    %853 = vmatpush.msra.mxu0 %v833
    %854 = vmatpush.msra.mxu0 %v832
    %855 = vmatpush.msra.mxu0 %v831
    %856 = vmatpush.msra.mxu0 %v830
    %857 = vmatmul.f32.gmra.mxu0 %v839
    %v858 = vpop.f32.mrf.mxu0
    %v859 = vadd.f32 %v836, %v858
    %860 = vdwg.mxu0
    %v861 = vadd.f32 %v828, %v859
    %v862 = vxor.u32 %v861, 2147483648
    %v863 = vmul.f32 %v862, 1.442695
    %v864 = vpow.pop %v863
    %v865 = vadd.f32 %v864, 1.0
    %v866 = vrcp.pop %v865
    %v867 = vmul.f32 %v865, %v866
    %v868 = vsub.f32 1.0, %v867
    %v869 = vmul.f32 %v866, %v868
    %v870 = vadd.f32 %v866, %v869
    %vm871 = vweird.f32 %v865
    %vm872 = vweird.f32 %v866
    %vm873 = vmor %vm871, %vm872
    %v874 = vsel %vm873, %v866, %v870
    %v875 = vand.u32 2147483647, %v865
    %vm876 = vcmp.eq.f32.partialorder %v875, 8.507059e+37
    %v877 = vand.u32 %v865, 2147483648
    %v878 = vor.u32 1.1754944e-38, %v877
    %v879 = vsel %vm876, %v878, %v874
    %v880 = vmul.f32 1.0, %v879
    %882 = vrot.lane.b32.xlu0 %v859, 64
    %v883 = vpop.permute.xlu0 %882
    %v885 = vmul.f32 %v880, %v883
    %887 = vrot.lane.b32.xlu0 %v885, 64
    %v888 = vpop.permute.xlu0 %887
    %v890 = vadd.f32 %v828, %v888
    %v891 = vtanh.pop %v890
    %v892 = vsub.f32 1.0, %v880
    %894 = vrot.lane.b32.xlu0 %v891, 96
    %v895 = vpop.permute.xlu0 %894
    %v897 = vmul.f32 %v892, %v895
    %898 = vrot.lane.b32.xlu0 %v829, 32
    %v899 = vpop.permute.xlu0 %898
    %v901 = vmul.f32 %v880, %v899
    %v902 = vadd.f32 %v897, %v901
    %904 = vrot.lane.b32.xlu0 %v902, 96
    %v905 = vpop.permute.xlu0 %904
    %907 = vst.msk [vmem:[#allocation5] sm:$0xff] %vm179, %v905
    %s908 = sld [smem:[#allocation8 + $0x1]]
    %s909 = ssub.s32 %s908, 1
    %v910 = vstv %s909
    %vm911 = vcmp.eq.s32.totalorder %v270, %v910
    %v912 = vsel %vm911, 1, 0
    %v913 = vcvt.s32.f32 %v912
    %v915 = vsel %vm357, %v913, 0
    %917 = vmatpush.msra.mxu0 0.0
    %918 = vmatpush.msra.mxu0 0.0
    %919 = vmatpush.msra.mxu0 0.0
    %920 = vmatpush.msra.mxu0 0.0
    %921 = vmatpush.msra.mxu0 0.0
    %922 = vmatpush.msra.mxu0 0.0
    %923 = vmatpush.msra.mxu0 0.0
    %924 = vmatpush.msra.mxu0 0.0
    %925 = vmatpush.msra.mxu0 0.0
    %926 = vmatpush.msra.mxu0 0.0
    %927 = vmatpush.msra.mxu0 0.0
    %928 = vmatpush.msra.mxu0 0.0
    %929 = vmatpush.msra.mxu0 0.0
    %930 = vmatpush.msra.mxu0 0.0
    %931 = vmatpush.msra.mxu0 0.0
    %932 = vmatpush.msra.mxu0 %v905
    %933 = vmatmul.f32.gmra.mxu0 %v915
    %v934 = vpop.f32.mrf.mxu0
    %v935 = vadd.f32 0.0, %v934
    %936 = vdwg.mxu0
    %937 = vst.msk [vmem:[#allocation7 + $0x1] sm:$0x1] %vm381, %v935
    %s938 = scalar_lea.vmem [#allocation2], 24
    %v939 = vld [vmem:[%s938] sm:$0xff]
    %v940 = vld [vmem:[#allocation4] sm:$0xff]
    %v941 = vld [vmem:[#allocation15] sm:$0xff]
    %v942 = vld [vmem:[#allocation15 + $0x8] sm:$0xff]
    %v943 = vld [vmem:[#allocation15 + $0x10] sm:$0xff]
    %v944 = vld [vmem:[#allocation15 + $0x18] sm:$0xff]
    %v945 = vld [vmem:[%s5] sm:$0x1]
    %v947 = vperm.slane %v945, 0
    %v950 = vsel %vm179, %v940, 0
    %952 = vmatpush.msra.mxu0 0.0
    %953 = vmatpush.msra.mxu0 0.0
    %954 = vmatpush.msra.mxu0 0.0
    %955 = vmatpush.msra.mxu0 0.0
    %956 = vmatpush.msra.mxu0 0.0
    %957 = vmatpush.msra.mxu0 0.0
    %958 = vmatpush.msra.mxu0 0.0
    %959 = vmatpush.msra.mxu0 0.0
    %960 = vmatpush.msra.mxu0 0.0
    %961 = vmatpush.msra.mxu0 0.0
    %962 = vmatpush.msra.mxu0 0.0
    %963 = vmatpush.msra.mxu0 0.0
    %964 = vmatpush.msra.mxu0 %v944
    %965 = vmatpush.msra.mxu0 %v943
    %966 = vmatpush.msra.mxu0 %v942
    %967 = vmatpush.msra.mxu0 %v941
    %968 = vmatmul.f32.gmra.mxu0 %v950
    %v969 = vpop.f32.mrf.mxu0
    %v970 = vadd.f32 %v947, %v969
    %971 = vdwg.mxu0
    %v972 = vadd.f32 %v939, %v970
    %v973 = vxor.u32 %v972, 2147483648
    %v974 = vmul.f32 %v973, 1.442695
    %v975 = vpow.pop %v974
    %v976 = vadd.f32 %v975, 1.0
    %v977 = vrcp.pop %v976
    %v978 = vmul.f32 %v976, %v977
    %v979 = vsub.f32 1.0, %v978
    %v980 = vmul.f32 %v977, %v979
    %v981 = vadd.f32 %v977, %v980
    %vm982 = vweird.f32 %v976
    %vm983 = vweird.f32 %v977
    %vm984 = vmor %vm982, %vm983
    %v985 = vsel %vm984, %v977, %v981
    %v986 = vand.u32 2147483647, %v976
    %vm987 = vcmp.eq.f32.partialorder %v986, 8.507059e+37
    %v988 = vand.u32 %v976, 2147483648
    %v989 = vor.u32 1.1754944e-38, %v988
    %v990 = vsel %vm987, %v989, %v985
    %v991 = vmul.f32 1.0, %v990
    %993 = vrot.lane.b32.xlu0 %v970, 64
    %v994 = vpop.permute.xlu0 %993
    %v996 = vmul.f32 %v991, %v994
    %998 = vrot.lane.b32.xlu0 %v996, 64
    %v999 = vpop.permute.xlu0 %998
    %v1001 = vadd.f32 %v939, %v999
    %v1002 = vtanh.pop %v1001
    %v1003 = vsub.f32 1.0, %v991
    %1005 = vrot.lane.b32.xlu0 %v1002, 96
    %v1006 = vpop.permute.xlu0 %1005
    %v1008 = vmul.f32 %v1003, %v1006
    %1009 = vrot.lane.b32.xlu0 %v940, 32
    %v1010 = vpop.permute.xlu0 %1009
    %v1012 = vmul.f32 %v991, %v1010
    %v1013 = vadd.f32 %v1008, %v1012
    %1015 = vrot.lane.b32.xlu0 %v1013, 96
    %v1016 = vpop.permute.xlu0 %1015
    %1018 = vst.msk [vmem:[#allocation4] sm:$0xff] %vm179, %v1016
    %s1019 = sld [smem:[#allocation8 + $0x3]]
    %s1020 = ssub.s32 %s1019, 1
    %v1021 = vstv %s1020
    %vm1022 = vcmp.eq.s32.totalorder %v270, %v1021
    %v1023 = vsel %vm1022, 1, 0
    %v1024 = vcvt.s32.f32 %v1023
    %v1026 = vsel %vm357, %v1024, 0
    %1028 = vmatpush.msra.mxu0 0.0
    %1029 = vmatpush.msra.mxu0 0.0
    %1030 = vmatpush.msra.mxu0 0.0
    %1031 = vmatpush.msra.mxu0 0.0
    %1032 = vmatpush.msra.mxu0 0.0
    %1033 = vmatpush.msra.mxu0 0.0
    %1034 = vmatpush.msra.mxu0 0.0
    %1035 = vmatpush.msra.mxu0 0.0
    %1036 = vmatpush.msra.mxu0 0.0
    %1037 = vmatpush.msra.mxu0 0.0
    %1038 = vmatpush.msra.mxu0 0.0
    %1039 = vmatpush.msra.mxu0 0.0
    %1040 = vmatpush.msra.mxu0 0.0
    %1041 = vmatpush.msra.mxu0 0.0
    %1042 = vmatpush.msra.mxu0 0.0
    %1043 = vmatpush.msra.mxu0 %v1016
    %1044 = vmatmul.f32.gmra.mxu0 %v1026
    %v1045 = vpop.f32.mrf.mxu0
    %v1046 = vadd.f32 0.0, %v1045
    %1047 = vdwg.mxu0
    %1048 = vst.msk [vmem:[#allocation6 + $0x3] sm:$0x1] %vm381, %v1046
    %v1049 = vld [vmem:[#allocation3] sm:$0xff]
    %v1050 = vld [vmem:[#allocation5] sm:$0xff]
    %v1051 = vld [vmem:[#allocation18] sm:$0xff]
    %v1052 = vld [vmem:[#allocation18 + $0x8] sm:$0xff]
    %v1053 = vld [vmem:[#allocation18 + $0x10] sm:$0xff]
    %v1054 = vld [vmem:[#allocation18 + $0x18] sm:$0xff]
    %v1055 = vld [vmem:[%s9] sm:$0x1]
    %v1057 = vperm.slane %v1055, 0
    %v1060 = vsel %vm179, %v1050, 0
    %1062 = vmatpush.msra.mxu0 0.0
    %1063 = vmatpush.msra.mxu0 0.0
    %1064 = vmatpush.msra.mxu0 0.0
    %1065 = vmatpush.msra.mxu0 0.0
    %1066 = vmatpush.msra.mxu0 0.0
    %1067 = vmatpush.msra.mxu0 0.0
    %1068 = vmatpush.msra.mxu0 0.0
    %1069 = vmatpush.msra.mxu0 0.0
    %1070 = vmatpush.msra.mxu0 0.0
    %1071 = vmatpush.msra.mxu0 0.0
    %1072 = vmatpush.msra.mxu0 0.0
    %1073 = vmatpush.msra.mxu0 0.0
    %1074 = vmatpush.msra.mxu0 %v1054
    %1075 = vmatpush.msra.mxu0 %v1053
    %1076 = vmatpush.msra.mxu0 %v1052
    %1077 = vmatpush.msra.mxu0 %v1051
    %1078 = vmatmul.f32.gmra.mxu0 %v1060
    %v1079 = vpop.f32.mrf.mxu0
    %v1080 = vadd.f32 %v1057, %v1079
    %1081 = vdwg.mxu0
    %v1082 = vadd.f32 %v1049, %v1080
    %v1083 = vxor.u32 %v1082, 2147483648
    %v1084 = vmul.f32 %v1083, 1.442695
    %v1085 = vpow.pop %v1084
    %v1086 = vadd.f32 %v1085, 1.0
    %v1087 = vrcp.pop %v1086
    %v1088 = vmul.f32 %v1086, %v1087
    %v1089 = vsub.f32 1.0, %v1088
    %v1090 = vmul.f32 %v1087, %v1089
    %v1091 = vadd.f32 %v1087, %v1090
    %vm1092 = vweird.f32 %v1086
    %vm1093 = vweird.f32 %v1087
    %vm1094 = vmor %vm1092, %vm1093
    %v1095 = vsel %vm1094, %v1087, %v1091
    %v1096 = vand.u32 2147483647, %v1086
    %vm1097 = vcmp.eq.f32.partialorder %v1096, 8.507059e+37
    %v1098 = vand.u32 %v1086, 2147483648
    %v1099 = vor.u32 1.1754944e-38, %v1098
    %v1100 = vsel %vm1097, %v1099, %v1095
    %v1101 = vmul.f32 1.0, %v1100
    %1103 = vrot.lane.b32.xlu0 %v1080, 64
    %v1104 = vpop.permute.xlu0 %1103
    %v1106 = vmul.f32 %v1101, %v1104
    %1108 = vrot.lane.b32.xlu0 %v1106, 64
    %v1109 = vpop.permute.xlu0 %1108
    %v1111 = vadd.f32 %v1049, %v1109
    %v1112 = vtanh.pop %v1111
    %v1113 = vsub.f32 1.0, %v1101
    %1115 = vrot.lane.b32.xlu0 %v1112, 96
    %v1116 = vpop.permute.xlu0 %1115
    %v1118 = vmul.f32 %v1113, %v1116
    %1119 = vrot.lane.b32.xlu0 %v1050, 32
    %v1120 = vpop.permute.xlu0 %1119
    %v1122 = vmul.f32 %v1101, %v1120
    %v1123 = vadd.f32 %v1118, %v1122
    %1125 = vrot.lane.b32.xlu0 %v1123, 96
    %v1126 = vpop.permute.xlu0 %1125
    %1128 = vst.msk [vmem:[#allocation5] sm:$0xff] %vm179, %v1126
    %s1129 = sld [smem:[#allocation8]]
    %s1130 = ssub.s32 %s1129, 1
    %v1131 = vstv %s1130
    %vm1132 = vcmp.eq.s32.totalorder %v270, %v1131
    %v1133 = vsel %vm1132, 1, 0
    %v1134 = vcvt.s32.f32 %v1133
    %v1136 = vsel %vm357, %v1134, 0
    %1138 = vmatpush.msra.mxu0 0.0
    %1139 = vmatpush.msra.mxu0 0.0
    %1140 = vmatpush.msra.mxu0 0.0
    %1141 = vmatpush.msra.mxu0 0.0
    %1142 = vmatpush.msra.mxu0 0.0
    %1143 = vmatpush.msra.mxu0 0.0
    %1144 = vmatpush.msra.mxu0 0.0
    %1145 = vmatpush.msra.mxu0 0.0
    %1146 = vmatpush.msra.mxu0 0.0
    %1147 = vmatpush.msra.mxu0 0.0
    %1148 = vmatpush.msra.mxu0 0.0
    %1149 = vmatpush.msra.mxu0 0.0
    %1150 = vmatpush.msra.mxu0 0.0
    %1151 = vmatpush.msra.mxu0 0.0
    %1152 = vmatpush.msra.mxu0 0.0
    %1153 = vmatpush.msra.mxu0 %v1126
    %1154 = vmatmul.f32.gmra.mxu0 %v1136
    %v1155 = vpop.f32.mrf.mxu0
    %v1156 = vadd.f32 0.0, %v1155
    %1157 = vdwg.mxu0
    %1158 = vst.msk [vmem:[#allocation7] sm:$0x1] %vm381, %v1156
    %v1159 = vld [vmem:[#allocation6] sm:$0xf]
    %v1160 = vld [vmem:[#allocation19] sm:$0xff]
    %v1161 = vld [vmem:[#allocation19 + $0x8] sm:$0xff]
    %v1162 = vld [vmem:[#allocation19 + $0x10] sm:$0xff]
    %v1163 = vld [vmem:[#allocation19 + $0x18] sm:$0xff]
    %v1164 = vld [vmem:[#allocation7] sm:$0xf]
    %v1165 = vld [vmem:[#allocation21] sm:$0xff]
    %v1166 = vld [vmem:[#allocation21 + $0x8] sm:$0xff]
    %v1167 = vld [vmem:[#allocation21 + $0x10] sm:$0xff]
    %v1168 = vld [vmem:[#allocation21 + $0x18] sm:$0xff]
    %v1170 = vsel %vm179, %v1164, 0
    %1172 = vmatpush.msra.mxu0 0.0
    %1173 = vmatpush.msra.mxu0 0.0
    %1174 = vmatpush.msra.mxu0 0.0
    %1175 = vmatpush.msra.mxu0 0.0
    %1176 = vmatpush.msra.mxu0 0.0
    %1177 = vmatpush.msra.mxu0 0.0
    %1178 = vmatpush.msra.mxu0 0.0
    %1179 = vmatpush.msra.mxu0 0.0
    %1180 = vmatpush.msra.mxu0 0.0
    %1181 = vmatpush.msra.mxu0 0.0
    %1182 = vmatpush.msra.mxu0 0.0
    %1183 = vmatpush.msra.mxu0 0.0
    %1184 = vmatpush.msra.mxu0 %v1168
    %1185 = vmatpush.msra.mxu0 %v1167
    %1186 = vmatpush.msra.mxu0 %v1166
    %1187 = vmatpush.msra.mxu0 %v1165
    %1188 = vmatmul.f32.gmra.mxu0 %v1170
    %v1189 = vpop.f32.mrf.mxu0
    %v1190 = vadd.f32 0.0, %v1189
    %1191 = vdwg.mxu0
    %v1193 = vsel %vm179, %v1159, 0
    %1195 = vmatpush.msra.mxu0 0.0
    %1196 = vmatpush.msra.mxu0 0.0
    %1197 = vmatpush.msra.mxu0 0.0
    %1198 = vmatpush.msra.mxu0 0.0
    %1199 = vmatpush.msra.mxu0 0.0
    %1200 = vmatpush.msra.mxu0 0.0
    %1201 = vmatpush.msra.mxu0 0.0
    %1202 = vmatpush.msra.mxu0 0.0
    %1203 = vmatpush.msra.mxu0 0.0
    %1204 = vmatpush.msra.mxu0 0.0
    %1205 = vmatpush.msra.mxu0 0.0
    %1206 = vmatpush.msra.mxu0 0.0
    %1207 = vmatpush.msra.mxu0 %v1163
    %1208 = vmatpush.msra.mxu0 %v1162
    %1209 = vmatpush.msra.mxu0 %v1161
    %1210 = vmatpush.msra.mxu0 %v1160
    %1211 = vmatmul.f32.gmra.mxu0 %v1193
    %v1212 = vpop.f32.mrf.mxu0
    %v1213 = vadd.f32 %v1190, %v1212
    %1214 = vdwg.mxu0
    %v1215 = vld [vmem:[%s12] sm:$0x1]
    %v1217 = vperm.slane %v1215, 0
    %v1219 = vadd.f32 %v1213, %v1217
    %1220 = vst [vmem:[#allocation22] sm:$0xf] %v1219
    // Predicated region
    $region86: #{tpu_custom_call.1} parent=1 // pred_check
      _
    $region87: #{tpu_custom_call.1} parent=1 // pred_check_branch
      %1222 = sbr.rel (0) target = $region89
    $region88: #{tpu_custom_call.1} parent=1 // pred_region
      %1224 = vsyncadd [#allocation10], 0
      %s1226 = sshll.u32 [#allocation22], 4
      %s1227 = int_to_ptr.vmem [resolvable:$true] %s1226
      %s1228 = sshll.u32 %s13, 4
      %s1229 = int_to_ptr.hbm [resolvable:$true] %s1228
      %1231 = dma.vmem_to_hbm [thread:$0]  %s1227, 64, %s1229, [#allocation10]
    $region89: #{tpu_custom_call.1} parent=1 // pred_fallthru
      _
    // Predicated region
    $region90: #{tpu_custom_call.1} parent=1 // pred_check
      _
    $region91: #{tpu_custom_call.1} parent=1 // pred_check_branch
      %1233 = sbr.rel (0) target = $region93
    $region92: #{tpu_custom_call.1} parent=1 // pred_region
      %1235 = dma.done [#allocation10], 64
    $region93: #{tpu_custom_call.1} parent=1 // pred_fallthru
      _
    %1236 = vsyncpa [#allocation9], 1
    %1237 = vsyncpa [#allocation14], 1
    %1238 = vsyncpa [#allocation17], 1
    %1239 = vsyncpa [#allocation20], 1
    %1240 = vsyncpa [#allocation10], 1
    %1241 = vsyncpa [#allocation11], 1

</llo_original>
